<compile_context>
chip_gen: v6e
topology: v6e:2x2x1
jax: 0.10.0
libtpu: 0.0.40
codegen_flags: <defaults>
</compile_context>

<pallas_src>
import functools

import numpy as np
import jax
import jax.numpy as jnp
from jax.experimental import pallas as pl
from jax.experimental.pallas import tpu as pltpu


_INV_SQRT2 = 0.7071067811865476
_SQRT_2_OVER_PI = 0.7978845608028654


def _erf_approx(x):
    # Abramowitz & Stegun 7.1.26 rational approximation of erf, |err| < 1.5e-7.
    # The divide is replaced by an EUP approximate reciprocal plus one
    # Newton-Raphson step: the long VALU divide sequence goes away while the
    # extra error (~eps^2) stays far below the polynomial's own 1.5e-7.
    a1, a2, a3, a4, a5 = (0.254829592, -0.284496736, 1.421413741,
                          -1.453152027, 1.061405429)
    p = 0.3275911
    ax = jnp.abs(x)
    d = 1.0 + p * ax
    t0 = pl.reciprocal(d, approx=True)      # EUP slot (otherwise idle)
    t = t0 * (2.0 - d * t0)                 # one Newton step -> ~f32 accuracy
    poly = ((((a5 * t + a4) * t + a3) * t + a2) * t + a1) * t
    y = 1.0 - poly * jnp.exp(-ax * ax)
    return jnp.where(x < 0, -y, y)


def _gelu(x, approximate=False):
    if approximate:
        # tanh-GELU: 1 EUP tanh + ~8 VALU ops; differs from torch's exact
        # erf GELU by ~1e-3 (opt-in only).
        x3 = x * x * x
        return 0.5 * x * (1.0 + jnp.tanh(_SQRT_2_OVER_PI * (x + 0.044715 * x3)))
    # Exact (erf-based) GELU, same as torch.nn.functional.gelu default.
    return 0.5 * x * (1.0 + _erf_approx(x * _INV_SQRT2))


# ------------------------------ Pallas kernel -------------------------------

def feedforward_kernel(w1_ref, b1_ref, w2_ref, b2_ref, x_ref, o_ref, *,
                       bn, n_chunks, cw, approximate, precision):
    """One (batch-block, spatial-tile) step of conv2(gelu(conv1(x))).

    w1_ref: [Cout, Cin]   b1_ref: [Cout, 1]
    w2_ref: [Cout, Cout]  b2_ref: [Cout, 1]
    x_ref : [BN, Cin, TW] o_ref : [BN, Cout, TW]

    The TW columns are processed in `n_chunks` static chunks of width `cw`
    so the fused GELU temporaries ([Cout, cw] f32) stay vreg-resident.
    """
    for b in range(bn):                       # small static unroll (BN <= 8)
        for c in range(n_chunks):             # small static unroll
            lo = c * cw
            x = x_ref[b, :, lo:lo + cw]                       # [Cin, CW]
            h = jnp.dot(w1_ref[...], x.astype(w1_ref.dtype),
                        preferred_element_type=jnp.float32,
                        precision=precision)
            h = h + b1_ref[...]                               # bias bcast over lanes
            h = _gelu(h, approximate=approximate)             # f32 activation
            o = jnp.dot(w2_ref[...], h.astype(w2_ref.dtype),
                        preferred_element_type=jnp.float32,
                        precision=precision)
            o = o + b2_ref[...]
            o_ref[b, :, lo:lo + cw] = o.astype(o_ref.dtype)


# ------------------------------ Wrapper (glue) -------------------------------

def _round_up(x, m):
    return ((x + m - 1) // m) * m


def _largest_tile(total, target, unit):
    """Largest multiple of `unit` that divides `total` and is <= target (>= unit)."""
    target = max(unit, min(total, (int(target) // unit) * unit))
    best = unit
    t = unit
    while t <= target:
        if total % t == 0:
            best = t
        t += unit
    return best


def feedforward_forward(x, w1, b1, w2, b2, *, col_tile=2048, compute_dtype=None,
                        precision=None, approximate_gelu=False):
    """x: [N, Cin, H, W]; w1: [Cout, Cin]; b1: [Cout]; w2: [Cout, Cout]; b2: [Cout]."""
    N, Cin, H, W = x.shape
    Cout = w1.shape[0]
    HW = H * W

    # Optional bf16 operand cast for v6e/v7x production channel counts
    # (keeps f32 accumulation via preferred_element_type).
    cdtype = jnp.dtype(compute_dtype) if compute_dtype is not None else jnp.dtype(x.dtype)
    w1c = w1.astype(cdtype)
    w2c = w2.astype(cdtype)
    b1c = b1.reshape(Cout, 1).astype(jnp.float32)
    b2c = b2.reshape(Cout, 1).astype(jnp.float32)

    # Lane-dense spatial axis: pad HW up to a multiple of 128 so every output
    # store is an unmasked vst and no tile reads undefined lanes.
    HW_pad = _round_up(HW, 128)
    x3 = x.reshape(N, Cin, HW)               # free reshape, spatial stays last
    if HW_pad != HW:
        x3 = jnp.pad(x3, ((0, 0), (0, 0), (0, HW_pad - HW)))

    xi = jnp.dtype(x.dtype).itemsize
    wi = cdtype.itemsize
    weight_bytes = (Cout * Cin + Cout * Cout) * wi + 2 * Cout * 4

    # VMEM budget: stay well under v7x's 64 MiB/TC (also fine for v5e/v6e).
    VMEM_BUDGET = 48 << 20
    io_budget = max(1 << 20, VMEM_BUDGET - 2 * weight_bytes - (4 << 20))
    col_bytes = 2 * (Cin + Cout) * xi         # double-buffered x+o bytes per column

    # Column tile: big (toward `col_tile`) to amortize per-grid-step overhead,
    # capped by the VMEM budget, always an exact multiple-of-128 divisor of HW_pad.
    tw_target = min(col_tile, io_budget // col_bytes)
    TW = _largest_tile(HW_pad, tw_target, 128)
    n_sp_tiles = HW_pad // TW

    # Batch blocking: when the whole (padded) spatial axis fits one tile, block
    # several batch elements per step to amortize step overhead, but keep >= 2
    # grid steps so both v7x TensorCores get work.
    if n_sp_tiles == 1 and N >= 4:
        bn_cap = max(1, io_budget // (TW * col_bytes))
        BN = _largest_tile(N, min(N // 2, bn_cap, 8), 1)
    else:
        BN = 1

    # In-kernel column chunk: keep ~3 live f32 [Cout, CW] temporaries within
    # the vreg file so the fused GELU doesn't spill at large Cout.
    cw_target = max(128, ((160 * 1024) // (12 * Cout) // 128) * 128)
    CW = _largest_tile(TW, cw_target, 128)
    n_chunks = TW // CW

    grid = (N // BN, HW_pad // TW)

    resident = 2 * weight_bytes + BN * TW * col_bytes
    vmem_limit = int(min(VMEM_BUDGET, max(32 << 20, 2 * resident + (2 << 20))))

    kernel = functools.partial(
        feedforward_kernel, bn=BN, n_chunks=n_chunks, cw=CW,
        approximate=approximate_gelu, precision=precision)

    x_spec = pl.BlockSpec((BN, Cin, TW), lambda n, j: (n, 0, j))
    o_spec = pl.BlockSpec((BN, Cout, TW), lambda n, j: (n, 0, j))

    def run(single_buffer_weights):
        if single_buffer_weights:
            # Constant-index weights/biases: one VMEM buffer is enough.
            def wspec(shape):
                return pl.BlockSpec(shape, lambda n, j: (0, 0),
                                    pipeline_mode=pl.Buffered(1))
        else:
            def wspec(shape):
                return pl.BlockSpec(shape, lambda n, j: (0, 0))
        return pl.pallas_call(
            kernel,
            out_shape=jax.ShapeDtypeStruct((N, Cout, HW_pad), x.dtype),
            grid=grid,
            in_specs=[
                wspec((Cout, Cin)),        # w1: VMEM-resident
                wspec((Cout, 1)),          # b1
                wspec((Cout, Cout)),       # w2
                wspec((Cout, 1)),          # b2
                x_spec,                    # x tile (double-buffered by Pallas)
            ],
            out_specs=o_spec,
            compiler_params=pltpu.CompilerParams(
                dimension_semantics=("parallel", "parallel"),  # megacore on v7x
                vmem_limit_bytes=vmem_limit),
        )(w1c, b1c, w2c, b2c, x3)

    try:
        out3 = run(single_buffer_weights=True)
    except Exception:
        # pl.Buffered(1) is a VMEM-only optimization; fall back to the default
        # double-buffered specs if this build rejects pipeline_mode here.
        out3 = run(single_buffer_weights=False)

    if HW_pad != HW:
        out3 = out3[:, :, :HW]
    return out3.reshape(N, Cout, H, W)


# --------------------------- pure-JAX reference ------------------------------

def feedforward_ref(x, w1, b1, w2, b2, precision=None):
    h = jnp.einsum('oc,nchw->nohw', w1, x, precision=precision) + b1[None, :, None, None]
    h = jax.nn.gelu(h, approximate=False)   # exact erf GELU, same as torch default
    return jnp.einsum('oc,nchw->nohw', w2, h, precision=precision) + b2[None, :, None, None]


# ----------------------------------- main ------------------------------------

if __name__ == "__main__":
    key = jax.random.PRNGKey(0)

    def init_params(k, c_in, c_out):
        k1, k2, k3, k4 = jax.random.split(k, 4)
        # PyTorch Conv2d(1x1) default init: U(-1/sqrt(fan_in), 1/sqrt(fan_in)).
        bound1 = 1.0 / np.sqrt(c_in)
        w1 = jax.random.uniform(k1, (c_out, c_in), jnp.float32, -bound1, bound1)
        b1 = jax.random.uniform(k2, (c_out,), jnp.float32, -bound1, bound1)
        bound2 = 1.0 / np.sqrt(c_out)
        w2 = jax.random.uniform(k3, (c_out, c_out), jnp.float32, -bound2, bound2)
        b2 = jax.random.uniform(k4, (c_out,), jnp.float32, -bound2, bound2)
        return w1, b1, w2, b2

    # Case 1: canonical small shape (batch=2, channels=4, 16x16 -> 32).
    # Case 2: HW not 128-aligned (8x8 -> padded to 128) + batch blocking (N=4 -> BN=2).
    # Case 3: larger channels (Cout=256) -> in-kernel column chunking; HIGHEST precision.
    cases = [
        dict(n=2, c_in=4, h=16, w=16, c_out=32, kwargs={}),
        dict(n=4, c_in=4, h=8, w=8, c_out=32, kwargs={}),
        dict(n=2, c_in=8, h=16, w=16, c_out=256,
             kwargs=dict(precision=jax.lax.Precision.HIGHEST)),
    ]

    for case in cases:
        key, kx, kp = jax.random.split(key, 3)
        x = jax.random.normal(kx, (case["n"], case["c_in"], case["h"], case["w"]),
                              jnp.float32)
        w1, b1, w2, b2 = init_params(kp, case["c_in"], case["c_out"])

        out = feedforward_forward(x, w1, b1, w2, b2, **case["kwargs"])
        out = jax.block_until_ready(out)

        ref = feedforward_ref(x, w1, b1, w2, b2,
                              precision=case["kwargs"].get("precision"))
        assert out.shape == (case["n"], case["c_out"], case["h"], case["w"])
        np.testing.assert_allclose(np.asarray(out), np.asarray(ref),
                                   rtol=2e-5, atol=2e-5)

    print("KERNEL_OK")
</pallas_src>

<mosaic_0001>
module attributes {stable_mosaic.version = 11 : i64} {
  func.func @feedforward_kernel(%arg0: i32, %arg1: i32, %arg2: memref<32x4xf32, #tpu.memory_space<vmem>>, %arg3: memref<32x1xf32, #tpu.memory_space<vmem>>, %arg4: memref<32x32xf32, #tpu.memory_space<vmem>>, %arg5: memref<32x1xf32, #tpu.memory_space<vmem>>, %arg6: memref<1x4x256xf32, #tpu.memory_space<vmem>>, %arg7: memref<1x32x256xf32, #tpu.memory_space<vmem>>) attributes {dimension_semantics = [#tpu.dimension_semantics<parallel>, #tpu.dimension_semantics<parallel>], iteration_bounds = array<i64: 2, 1>, scalar_prefetch = 0 : i64, scratch_operands = 0 : i64, tpu.core_type = #tpu.core_type<tc>, window_params = [{pipeline_mode = #tpu.pipeline_mode<synchronous>, transform_indices = @transform_0, window_bounds = array<i64: 32, 4>}, {pipeline_mode = #tpu.pipeline_mode<synchronous>, transform_indices = @transform_1, window_bounds = array<i64: 32, 1>}, {pipeline_mode = #tpu.pipeline_mode<synchronous>, transform_indices = @transform_2, window_bounds = array<i64: 32, 32>}, {pipeline_mode = #tpu.pipeline_mode<synchronous>, transform_indices = @transform_3, window_bounds = array<i64: 32, 1>}, {transform_indices = @transform_4, window_bounds = array<i64: 1, 4, 256>}, {transform_indices = @transform_5, window_bounds = array<i64: 1, 32, 256>}]} {
    %c0 = arith.constant 0 : index
    %c0_0 = arith.constant 0 : index
    %c0_1 = arith.constant 0 : index
    %0 = vector.load %arg6[%c0, %c0_0, %c0_1] : memref<1x4x256xf32, #tpu.memory_space<vmem>>, vector<1x4x256xf32>
    %1 = vector.shape_cast %0 : vector<1x4x256xf32> to vector<4x256xf32>
    %c0_2 = arith.constant 0 : index
    %c0_3 = arith.constant 0 : index
    %2 = vector.load %arg2[%c0_2, %c0_3] : memref<32x4xf32, #tpu.memory_space<vmem>>, vector<32x4xf32>
    %cst = arith.constant dense<0.000000e+00> : vector<32x256xf32>
    %3 = tpu.matmul %2, %1, %cst {dimension_numbers = #tpu.dot_dimension_numbers<[1], [0], [0], [1], [0, 0, 1, 1], [], []>} : vector<32x4xf32>, vector<4x256xf32>, vector<32x256xf32> -> vector<32x256xf32>
    %c0_4 = arith.constant 0 : index
    %c0_5 = arith.constant 0 : index
    %4 = vector.load %arg3[%c0_4, %c0_5] : memref<32x1xf32, #tpu.memory_space<vmem>>, vector<32x1xf32>
    %5 = vector.broadcast %4 : vector<32x1xf32> to vector<32x256xf32>
    %6 = arith.addf %3, %5 : vector<32x256xf32>
    %cst_6 = arith.constant 5.000000e-01 : f32
    %7 = vector.broadcast %cst_6 : f32 to vector<32x256xf32>
    %8 = arith.mulf %7, %6 : vector<32x256xf32>
    %cst_7 = arith.constant 0.707106769 : f32
    %9 = vector.broadcast %cst_7 : f32 to vector<32x256xf32>
    %10 = arith.mulf %6, %9 : vector<32x256xf32>
    %11 = math.absf %10 : vector<32x256xf32>
    %cst_8 = arith.constant 0.327591091 : f32
    %12 = vector.broadcast %cst_8 : f32 to vector<32x256xf32>
    %13 = arith.mulf %12, %11 : vector<32x256xf32>
    %cst_9 = arith.constant 1.000000e+00 : f32
    %14 = vector.broadcast %cst_9 : f32 to vector<32x256xf32>
    %15 = arith.addf %14, %13 : vector<32x256xf32>
    %16 = tpu.reciprocal %15 {approx = true} : vector<32x256xf32> -> vector<32x256xf32>
    %17 = arith.mulf %15, %16 : vector<32x256xf32>
    %cst_10 = arith.constant 2.000000e+00 : f32
    %18 = vector.broadcast %cst_10 : f32 to vector<32x256xf32>
    %19 = arith.subf %18, %17 : vector<32x256xf32>
    %20 = arith.mulf %16, %19 : vector<32x256xf32>
    %cst_11 = arith.constant 1.06140542 : f32
    %21 = vector.broadcast %cst_11 : f32 to vector<32x256xf32>
    %22 = arith.mulf %21, %20 : vector<32x256xf32>
    %cst_12 = arith.constant -1.45315206 : f32
    %23 = vector.broadcast %cst_12 : f32 to vector<32x256xf32>
    %24 = arith.addf %22, %23 : vector<32x256xf32>
    %25 = arith.mulf %24, %20 : vector<32x256xf32>
    %cst_13 = arith.constant 1.42141378 : f32
    %26 = vector.broadcast %cst_13 : f32 to vector<32x256xf32>
    %27 = arith.addf %25, %26 : vector<32x256xf32>
    %28 = arith.mulf %27, %20 : vector<32x256xf32>
    %cst_14 = arith.constant -0.284496725 : f32
    %29 = vector.broadcast %cst_14 : f32 to vector<32x256xf32>
    %30 = arith.addf %28, %29 : vector<32x256xf32>
    %31 = arith.mulf %30, %20 : vector<32x256xf32>
    %cst_15 = arith.constant 0.254829586 : f32
    %32 = vector.broadcast %cst_15 : f32 to vector<32x256xf32>
    %33 = arith.addf %31, %32 : vector<32x256xf32>
    %34 = arith.mulf %33, %20 : vector<32x256xf32>
    %cst_16 = arith.constant 0.000000e+00 : f32
    %35 = vector.broadcast %cst_16 : f32 to vector<32x256xf32>
    %36 = arith.subf %35, %11 : vector<32x256xf32>
    %37 = arith.mulf %36, %11 : vector<32x256xf32>
    %38 = math.exp %37 : vector<32x256xf32>
    %39 = arith.mulf %34, %38 : vector<32x256xf32>
    %cst_17 = arith.constant 1.000000e+00 : f32
    %40 = vector.broadcast %cst_17 : f32 to vector<32x256xf32>
    %41 = arith.subf %40, %39 : vector<32x256xf32>
    %cst_18 = arith.constant 0.000000e+00 : f32
    %42 = vector.broadcast %cst_18 : f32 to vector<32x256xf32>
    %43 = arith.cmpf olt, %10, %42 : vector<32x256xf32>
    %cst_19 = arith.constant 0.000000e+00 : f32
    %44 = vector.broadcast %cst_19 : f32 to vector<32x256xf32>
    %45 = arith.subf %44, %41 : vector<32x256xf32>
    %46 = arith.select %43, %45, %41 : vector<32x256xi1>, vector<32x256xf32>
    %cst_20 = arith.constant 1.000000e+00 : f32
    %47 = vector.broadcast %cst_20 : f32 to vector<32x256xf32>
    %48 = arith.addf %47, %46 : vector<32x256xf32>
    %49 = arith.mulf %8, %48 : vector<32x256xf32>
    %c0_21 = arith.constant 0 : index
    %c0_22 = arith.constant 0 : index
    %50 = vector.load %arg4[%c0_21, %c0_22] : memref<32x32xf32, #tpu.memory_space<vmem>>, vector<32x32xf32>
    %cst_23 = arith.constant dense<0.000000e+00> : vector<32x256xf32>
    %51 = tpu.matmul %50, %49, %cst_23 {dimension_numbers = #tpu.dot_dimension_numbers<[1], [0], [0], [1], [0, 0, 1, 1], [], []>} : vector<32x32xf32>, vector<32x256xf32>, vector<32x256xf32> -> vector<32x256xf32>
    %c0_24 = arith.constant 0 : index
    %c0_25 = arith.constant 0 : index
    %52 = vector.load %arg5[%c0_24, %c0_25] : memref<32x1xf32, #tpu.memory_space<vmem>>, vector<32x1xf32>
    %53 = vector.broadcast %52 : vector<32x1xf32> to vector<32x256xf32>
    %54 = arith.addf %51, %53 : vector<32x256xf32>
    %c0_26 = arith.constant 0 : index
    %c0_27 = arith.constant 0 : index
    %c0_28 = arith.constant 0 : index
    %55 = vector.load %arg7[%c0_26, %c0_27, %c0_28] : memref<1x32x256xf32, #tpu.memory_space<vmem>>, vector<1x32x256xf32>
    %56 = vector.shape_cast %55 : vector<1x32x256xf32> to vector<32x256xf32>
    %57 = vector.shape_cast %54 : vector<32x256xf32> to vector<1x32x256xf32>
    tpu.vector_store %arg7[%c0_26, %c0_27, %c0_28], %57 {strides = array<i32>} : memref<1x32x256xf32, #tpu.memory_space<vmem>>, vector<1x32x256xf32>,
    return
  }
  func.func @transform_0(%arg0: i32, %arg1: i32) -> (i32, i32) {
    %c0_i32 = arith.constant 0 : i32
    %c0_i32_0 = arith.constant 0 : i32
    %c0_i32_1 = arith.constant 0 : i32
    return %c0_i32, %c0_i32_0 : i32, i32
  }
  func.func @transform_1(%arg0: i32, %arg1: i32) -> (i32, i32) {
    %c0_i32 = arith.constant 0 : i32
    %c0_i32_0 = arith.constant 0 : i32
    %c0_i32_1 = arith.constant 0 : i32
    return %c0_i32, %c0_i32_0 : i32, i32
  }
  func.func @transform_2(%arg0: i32, %arg1: i32) -> (i32, i32) {
    %c0_i32 = arith.constant 0 : i32
    %c0_i32_0 = arith.constant 0 : i32
    %c0_i32_1 = arith.constant 0 : i32
    return %c0_i32, %c0_i32_0 : i32, i32
  }
  func.func @transform_3(%arg0: i32, %arg1: i32) -> (i32, i32) {
    %c0_i32 = arith.constant 0 : i32
    %c0_i32_0 = arith.constant 0 : i32
    %c0_i32_1 = arith.constant 0 : i32
    return %c0_i32, %c0_i32_0 : i32, i32
  }
  func.func @transform_4(%arg0: i32, %arg1: i32) -> (i32, i32, i32) {
    %c0_i32 = arith.constant 0 : i32
    %c0_i32_0 = arith.constant 0 : i32
    return %arg0, %c0_i32, %arg1 : i32, i32, i32
  }
  func.func @transform_5(%arg0: i32, %arg1: i32) -> (i32, i32, i32) {
    %c0_i32 = arith.constant 0 : i32
    %c0_i32_0 = arith.constant 0 : i32
    return %arg0, %c0_i32, %arg1 : i32, i32, i32
  }
}

module attributes {stable_mosaic.version = 11 : i64} {
  func.func @feedforward_kernel(%arg0: i32, %arg1: i32, %arg2: memref<32x4xf32, #tpu.memory_space<vmem>>, %arg3: memref<32x1xf32, #tpu.memory_space<vmem>>, %arg4: memref<32x32xf32, #tpu.memory_space<vmem>>, %arg5: memref<32x1xf32, #tpu.memory_space<vmem>>, %arg6: memref<1x4x256xf32, #tpu.memory_space<vmem>>, %arg7: memref<1x32x256xf32, #tpu.memory_space<vmem>>) attributes {dimension_semantics = [#tpu.dimension_semantics<parallel>, #tpu.dimension_semantics<parallel>], iteration_bounds = array<i64: 2, 1>, scalar_prefetch = 0 : i64, scratch_operands = 0 : i64, tpu.core_type = #tpu.core_type<tc>, window_params = [{pipeline_mode = #tpu.pipeline_mode<synchronous>, transform_indices = @transform_0, window_bounds = array<i64: 32, 4>}, {pipeline_mode = #tpu.pipeline_mode<synchronous>, transform_indices = @transform_1, window_bounds = array<i64: 32, 1>}, {pipeline_mode = #tpu.pipeline_mode<synchronous>, transform_indices = @transform_2, window_bounds = array<i64: 32, 32>}, {pipeline_mode = #tpu.pipeline_mode<synchronous>, transform_indices = @transform_3, window_bounds = array<i64: 32, 1>}, {transform_indices = @transform_4, window_bounds = array<i64: 1, 4, 256>}, {transform_indices = @transform_5, window_bounds = array<i64: 1, 32, 256>}]} {
    %c0 = arith.constant 0 : index
    %c0_0 = arith.constant 0 : index
    %c0_1 = arith.constant 0 : index
    %0 = vector.load %arg6[%c0, %c0_0, %c0_1] : memref<1x4x256xf32, #tpu.memory_space<vmem>>, vector<1x4x256xf32>
    %1 = vector.shape_cast %0 : vector<1x4x256xf32> to vector<4x256xf32>
    %c0_2 = arith.constant 0 : index
    %c0_3 = arith.constant 0 : index
    %2 = vector.load %arg2[%c0_2, %c0_3] : memref<32x4xf32, #tpu.memory_space<vmem>>, vector<32x4xf32>
    %cst = arith.constant dense<0.000000e+00> : vector<32x256xf32>
    %3 = tpu.matmul %2, %1, %cst {dimension_numbers = #tpu.dot_dimension_numbers<[1], [0], [0], [1], [0, 0, 1, 1], [], []>} : vector<32x4xf32>, vector<4x256xf32>, vector<32x256xf32> -> vector<32x256xf32>
    %c0_4 = arith.constant 0 : index
    %c0_5 = arith.constant 0 : index
    %4 = vector.load %arg3[%c0_4, %c0_5] : memref<32x1xf32, #tpu.memory_space<vmem>>, vector<32x1xf32>
    %5 = vector.broadcast %4 : vector<32x1xf32> to vector<32x256xf32>
    %6 = arith.addf %3, %5 : vector<32x256xf32>
    %cst_6 = arith.constant 5.000000e-01 : f32
    %7 = vector.broadcast %cst_6 : f32 to vector<32x256xf32>
    %8 = arith.mulf %7, %6 : vector<32x256xf32>
    %cst_7 = arith.constant 0.707106769 : f32
    %9 = vector.broadcast %cst_7 : f32 to vector<32x256xf32>
    %10 = arith.mulf %6, %9 : vector<32x256xf32>
    %11 = math.absf %10 : vector<32x256xf32>
    %cst_8 = arith.constant 0.327591091 : f32
    %12 = vector.broadcast %cst_8 : f32 to vector<32x256xf32>
    %13 = arith.mulf %12, %11 : vector<32x256xf32>
    %cst_9 = arith.constant 1.000000e+00 : f32
    %14 = vector.broadcast %cst_9 : f32 to vector<32x256xf32>
    %15 = arith.addf %14, %13 : vector<32x256xf32>
    %16 = tpu.reciprocal %15 {approx = true} : vector<32x256xf32> -> vector<32x256xf32>
    %17 = arith.mulf %15, %16 : vector<32x256xf32>
    %cst_10 = arith.constant 2.000000e+00 : f32
    %18 = vector.broadcast %cst_10 : f32 to vector<32x256xf32>
    %19 = arith.subf %18, %17 : vector<32x256xf32>
    %20 = arith.mulf %16, %19 : vector<32x256xf32>
    %cst_11 = arith.constant 1.06140542 : f32
    %21 = vector.broadcast %cst_11 : f32 to vector<32x256xf32>
    %22 = arith.mulf %21, %20 : vector<32x256xf32>
    %cst_12 = arith.constant -1.45315206 : f32
    %23 = vector.broadcast %cst_12 : f32 to vector<32x256xf32>
    %24 = arith.addf %22, %23 : vector<32x256xf32>
    %25 = arith.mulf %24, %20 : vector<32x256xf32>
    %cst_13 = arith.constant 1.42141378 : f32
    %26 = vector.broadcast %cst_13 : f32 to vector<32x256xf32>
    %27 = arith.addf %25, %26 : vector<32x256xf32>
    %28 = arith.mulf %27, %20 : vector<32x256xf32>
    %cst_14 = arith.constant -0.284496725 : f32
    %29 = vector.broadcast %cst_14 : f32 to vector<32x256xf32>
    %30 = arith.addf %28, %29 : vector<32x256xf32>
    %31 = arith.mulf %30, %20 : vector<32x256xf32>
    %cst_15 = arith.constant 0.254829586 : f32
    %32 = vector.broadcast %cst_15 : f32 to vector<32x256xf32>
    %33 = arith.addf %31, %32 : vector<32x256xf32>
    %34 = arith.mulf %33, %20 : vector<32x256xf32>
    %cst_16 = arith.constant 0.000000e+00 : f32
    %35 = vector.broadcast %cst_16 : f32 to vector<32x256xf32>
    %36 = arith.subf %35, %11 : vector<32x256xf32>
    %37 = arith.mulf %36, %11 : vector<32x256xf32>
    %38 = math.exp %37 : vector<32x256xf32>
    %39 = arith.mulf %34, %38 : vector<32x256xf32>
    %cst_17 = arith.constant 1.000000e+00 : f32
    %40 = vector.broadcast %cst_17 : f32 to vector<32x256xf32>
    %41 = arith.subf %40, %39 : vector<32x256xf32>
    %cst_18 = arith.constant 0.000000e+00 : f32
    %42 = vector.broadcast %cst_18 : f32 to vector<32x256xf32>
    %43 = arith.cmpf olt, %10, %42 : vector<32x256xf32>
    %cst_19 = arith.constant 0.000000e+00 : f32
    %44 = vector.broadcast %cst_19 : f32 to vector<32x256xf32>
    %45 = arith.subf %44, %41 : vector<32x256xf32>
    %46 = arith.select %43, %45, %41 : vector<32x256xi1>, vector<32x256xf32>
    %cst_20 = arith.constant 1.000000e+00 : f32
    %47 = vector.broadcast %cst_20 : f32 to vector<32x256xf32>
    %48 = arith.addf %47, %46 : vector<32x256xf32>
    %49 = arith.mulf %8, %48 : vector<32x256xf32>
    %c0_21 = arith.constant 0 : index
    %c0_22 = arith.constant 0 : index
    %50 = vector.load %arg4[%c0_21, %c0_22] : memref<32x32xf32, #tpu.memory_space<vmem>>, vector<32x32xf32>
    %cst_23 = arith.constant dense<0.000000e+00> : vector<32x256xf32>
    %51 = tpu.matmul %50, %49, %cst_23 {dimension_numbers = #tpu.dot_dimension_numbers<[1], [0], [0], [1], [0, 0, 1, 1], [], []>} : vector<32x32xf32>, vector<32x256xf32>, vector<32x256xf32> -> vector<32x256xf32>
    %c0_24 = arith.constant 0 : index
    %c0_25 = arith.constant 0 : index
    %52 = vector.load %arg5[%c0_24, %c0_25] : memref<32x1xf32, #tpu.memory_space<vmem>>, vector<32x1xf32>
    %53 = vector.broadcast %52 : vector<32x1xf32> to vector<32x256xf32>
    %54 = arith.addf %51, %53 : vector<32x256xf32>
    %c0_26 = arith.constant 0 : index
    %c0_27 = arith.constant 0 : index
    %c0_28 = arith.constant 0 : index
    %55 = vector.load %arg7[%c0_26, %c0_27, %c0_28] : memref<1x32x256xf32, #tpu.memory_space<vmem>>, vector<1x32x256xf32>
    %56 = vector.shape_cast %55 : vector<1x32x256xf32> to vector<32x256xf32>
    %57 = vector.shape_cast %54 : vector<32x256xf32> to vector<1x32x256xf32>
    tpu.vector_store %arg7[%c0_26, %c0_27, %c0_28], %57 {strides = array<i32>} : memref<1x32x256xf32, #tpu.memory_space<vmem>>, vector<1x32x256xf32>,
    return
  }
  func.func @transform_0(%arg0: i32, %arg1: i32) -> (i32, i32) {
    %c0_i32 = arith.constant 0 : i32
    %c0_i32_0 = arith.constant 0 : i32
    %c0_i32_1 = arith.constant 0 : i32
    return %c0_i32, %c0_i32_0 : i32, i32
  }
  func.func @transform_1(%arg0: i32, %arg1: i32) -> (i32, i32) {
    %c0_i32 = arith.constant 0 : i32
    %c0_i32_0 = arith.constant 0 : i32
    %c0_i32_1 = arith.constant 0 : i32
    return %c0_i32, %c0_i32_0 : i32, i32
  }
  func.func @transform_2(%arg0: i32, %arg1: i32) -> (i32, i32) {
    %c0_i32 = arith.constant 0 : i32
    %c0_i32_0 = arith.constant 0 : i32
    %c0_i32_1 = arith.constant 0 : i32
    return %c0_i32, %c0_i32_0 : i32, i32
  }
  func.func @transform_3(%arg0: i32, %arg1: i32) -> (i32, i32) {
    %c0_i32 = arith.constant 0 : i32
    %c0_i32_0 = arith.constant 0 : i32
    %c0_i32_1 = arith.constant 0 : i32
    return %c0_i32, %c0_i32_0 : i32, i32
  }
  func.func @transform_4(%arg0: i32, %arg1: i32) -> (i32, i32, i32) {
    %c0_i32 = arith.constant 0 : i32
    %c0_i32_0 = arith.constant 0 : i32
    return %arg0, %c0_i32, %arg1 : i32, i32, i32
  }
  func.func @transform_5(%arg0: i32, %arg1: i32) -> (i32, i32, i32) {
    %c0_i32 = arith.constant 0 : i32
    %c0_i32_0 = arith.constant 0 : i32
    return %arg0, %c0_i32, %arg1 : i32, i32, i32
  }
}

</mosaic_0001>

<llo_original>
// kernel: tpu_custom_call.1
$region0: #{tpu_custom_call.1}
  #allocation0 [shape = 'u32[]', space=smem, size = 0x4, offset = 0x4, fixed_abs, tag = 'smem constant byte address 0x4 - core index']
  #allocation1 [shape = 'u32[144,128]{1,0:T(1,128)}', space=vmem, size = 0x12000, scoped, tag = 'internal scratch']
  %s0 = inlined_call_operand.vmem [shape: f32[32,4], index: 0, kind: input, shape index: {}]
  %s1 = inlined_call_operand.vmem [shape: f32[32,1], index: 1, kind: input, shape index: {}]
  %s2 = inlined_call_operand.vmem [shape: f32[32,32], index: 2, kind: input, shape index: {}]
  %s3 = inlined_call_operand.vmem [shape: f32[32,1], index: 3, kind: input, shape index: {}]
  %s4 = inlined_call_operand.vmem [shape: f32[2,4,256], index: 4, kind: input, shape index: {}]
  %s5 = inlined_call_operand.hbm [shape: f32[2,32,256], index: 5, kind: output, shape index: {}]
  %s6 = sld [smem:[#allocation0]]
  $region53: #{tpu_custom_call.1} parent=0
    _
  %s8 = ssub.s32 1, %s6
  %s9 = scalar_select 0, %s8, %s6
  $region1: #{tpu_custom_call.1} parent=0
    #allocation2 [shape = 'u8[65536]{0}', space=vmem, size = 0x10000, scoped, tag = 'output window, operand 0']
    #allocation3 [shape = 's32[2]{0}', space=sflag, size = 0x8, scoped, tag = 'scoped memory for tpu_custom_call.1']
    %10 = vsyncpa [#allocation3], 0
    %s11 = scalar_lea.sflag [#allocation3], 1
    %12 = vsyncpa %s11, 0
    loop: start=0, step=1, limit=4
    $region2: #{tpu_custom_call.1} parent=1 // loop_pre_header
      _
    $region3: #{tpu_custom_call.1} parent=1 // loop_header
      %s14 = sphi 0, %s18
      %p15 = scmp.ge.s32.totalorder %s14, 4
      %s21 = sphi 0, %s33
      %s22 = sphi 0, %s29
      %s23 = sphi 0, %s21
      %s24 = sphi 0, %s22
      %s25 = sphi 0, %s23
      %s26 = sphi 0, %s24
      %s34 = sphi 0, %s34
      %s36 = sphi 0, %s34
      %s37 = sphi 0, %s36
      %s51 = sphi 0, %s37
      %s55 = sphi 0, %s55
      %s57 = sphi 0, %s55
      %s58 = sphi 0, %s57
      %s72 = sphi 0, %s58
      %s76 = sphi 0, %s76
      %s78 = sphi 0, %s76
      %s79 = sphi 0, %s78
      %s93 = sphi 0, %s79
      %s97 = sphi 0, %s97
      %s99 = sphi 0, %s97
      %s100 = sphi 0, %s99
      %s114 = sphi 0, %s100
      %s122 = sphi 0, %s124
      %s125 = sphi 0, %s122
      %s126 = sphi 0, %s125
      %s142 = sphi 0, %s126
      %s150 = sphi 0, %s152
      %s153 = sphi 0, %s150
      %s154 = sphi 0, %s153
      %s170 = sphi 0, %s154
    $region4: #{tpu_custom_call.1} parent=1 // loop_header_branch
      %17 = sbr.rel (%p15) target = $region8
    $region5: #{tpu_custom_call.1} parent=1 // loop_body
      %s19 = ssub.s32 %s14, 1
      %s20 = ssub.s32 %s14, 2
      %s27 = sadd.s32 1, %s22
      %p28 = scmp.ge.s32.totalorder %s27, 1
      %s29 = scalar_select %p28, 0, %s27
      %s30 = sadd.s32 1, %s21
      %s31 = scalar_select %p28, %s30, %s21
      %p32 = scmp.ge.s32.totalorder %s31, 2
      %s33 = scalar_select %p32, 0, %s31
      %s35 = sadd.s32 %s34, 1
      %p38 = scmp.eq.s32.totalorder %s14, 1
      %p39 = scmp.ne.s32.totalorder %s34, %s36
      %p40 = scmp.eq.s32.totalorder %s14, 0
      %p41 = por %p39, %p40
      %p42 = scmp.ne.s32.totalorder %s34, %s36
      %p43 = scmp.eq.s32.totalorder %s19, 1
      %p44 = por %p42, %p43
      %p45 = scmp.ne.s32.totalorder %s36, %s37
      %p46 = scmp.eq.s32.totalorder %s19, 0
      %p47 = por %p45, %p46
      %p48 = scmp.ne.s32.totalorder %s36, %s37
      %p49 = scmp.eq.s32.totalorder %s20, 1
      %p50 = por %p48, %p49
      %p52 = scmp.ne.s32.totalorder %s37, %s51
      %p53 = scmp.eq.s32.totalorder %s20, 0
      %p54 = por %p52, %p53
      %s56 = sadd.s32 %s55, 1
      %p59 = scmp.eq.s32.totalorder %s14, 1
      %p60 = scmp.ne.s32.totalorder %s55, %s57
      %p61 = scmp.eq.s32.totalorder %s14, 0
      %p62 = por %p60, %p61
      %p63 = scmp.ne.s32.totalorder %s55, %s57
      %p64 = scmp.eq.s32.totalorder %s19, 1
      %p65 = por %p63, %p64
      %p66 = scmp.ne.s32.totalorder %s57, %s58
      %p67 = scmp.eq.s32.totalorder %s19, 0
      %p68 = por %p66, %p67
      %p69 = scmp.ne.s32.totalorder %s57, %s58
      %p70 = scmp.eq.s32.totalorder %s20, 1
      %p71 = por %p69, %p70
      %p73 = scmp.ne.s32.totalorder %s58, %s72
      %p74 = scmp.eq.s32.totalorder %s20, 0
      %p75 = por %p73, %p74
      %s77 = sadd.s32 %s76, 1
      %p80 = scmp.eq.s32.totalorder %s14, 1
      %p81 = scmp.ne.s32.totalorder %s76, %s78
      %p82 = scmp.eq.s32.totalorder %s14, 0
      %p83 = por %p81, %p82
      %p84 = scmp.ne.s32.totalorder %s76, %s78
      %p85 = scmp.eq.s32.totalorder %s19, 1
      %p86 = por %p84, %p85
      %p87 = scmp.ne.s32.totalorder %s78, %s79
      %p88 = scmp.eq.s32.totalorder %s19, 0
      %p89 = por %p87, %p88
      %p90 = scmp.ne.s32.totalorder %s78, %s79
      %p91 = scmp.eq.s32.totalorder %s20, 1
      %p92 = por %p90, %p91
      %p94 = scmp.ne.s32.totalorder %s79, %s93
      %p95 = scmp.eq.s32.totalorder %s20, 0
      %p96 = por %p94, %p95
      %s98 = sadd.s32 %s97, 1
      %p101 = scmp.eq.s32.totalorder %s14, 1
      %p102 = scmp.ne.s32.totalorder %s97, %s99
      %p103 = scmp.eq.s32.totalorder %s14, 0
      %p104 = por %p102, %p103
      %p105 = scmp.ne.s32.totalorder %s97, %s99
      %p106 = scmp.eq.s32.totalorder %s19, 1
      %p107 = por %p105, %p106
      %p108 = scmp.ne.s32.totalorder %s99, %s100
      %p109 = scmp.eq.s32.totalorder %s19, 0
      %p110 = por %p108, %p109
      %p111 = scmp.ne.s32.totalorder %s99, %s100
      %p112 = scmp.eq.s32.totalorder %s20, 1
      %p113 = por %p111, %p112
      %p115 = scmp.ne.s32.totalorder %s100, %s114
      %p116 = scmp.eq.s32.totalorder %s20, 0
      %p117 = por %p115, %p116
      %s118 = ssub.s32 %s21, %s33
      %s119 = ssub.s32 %s22, %s29
      %s120 = sor.u32 %s118, %s119
      %p121 = scmp.eq.s32.totalorder %s120, 0
      %s123 = sadd.s32 %s122, 1
      %s124 = scalar_select %p121, %s122, %s123
      %p127 = pneg %p121
      %p128 = scmp.eq.s32.totalorder %s14, 1
      %p129 = por %p127, %p128
      %p130 = scmp.ne.s32.totalorder %s122, %s125
      %p131 = scmp.eq.s32.totalorder %s14, 0
      %p132 = por %p130, %p131
      %p133 = scmp.ne.s32.totalorder %s122, %s125
      %p134 = scmp.eq.s32.totalorder %s19, 1
      %p135 = por %p133, %p134
      %p136 = scmp.ne.s32.totalorder %s125, %s126
      %p137 = scmp.eq.s32.totalorder %s19, 0
      %p138 = por %p136, %p137
      %p139 = scmp.ne.s32.totalorder %s125, %s126
      %p140 = scmp.eq.s32.totalorder %s20, 1
      %p141 = por %p139, %p140
      %p143 = scmp.ne.s32.totalorder %s126, %s142
      %p144 = scmp.eq.s32.totalorder %s20, 0
      %p145 = por %p143, %p144
      %s146 = ssub.s32 %s21, %s33
      %s147 = ssub.s32 %s22, %s29
      %s148 = sor.u32 %s146, %s147
      %p149 = scmp.eq.s32.totalorder %s148, 0
      %s151 = sadd.s32 %s150, 1
      %s152 = scalar_select %p149, %s150, %s151
      %p155 = pneg %p149
      %p156 = scmp.eq.s32.totalorder %s14, 1
      %p157 = por %p155, %p156
      %p158 = scmp.ne.s32.totalorder %s150, %s153
      %p159 = scmp.eq.s32.totalorder %s14, 0
      %p160 = por %p158, %p159
      %p161 = scmp.ne.s32.totalorder %s150, %s153
      %p162 = scmp.eq.s32.totalorder %s19, 1
      %p163 = por %p161, %p162
      %p164 = scmp.ne.s32.totalorder %s153, %s154
      %p165 = scmp.eq.s32.totalorder %s19, 0
      %p166 = por %p164, %p165
      %p167 = scmp.ne.s32.totalorder %s153, %s154
      %p168 = scmp.eq.s32.totalorder %s20, 1
      %p169 = por %p167, %p168
      %p171 = scmp.ne.s32.totalorder %s154, %s170
      %p172 = scmp.eq.s32.totalorder %s20, 0
      %p173 = por %p171, %p172
      %p174 = scmp.le.s32.totalorder 1, %s14
      %p175 = scmp.lt.s32.totalorder %s14, 3
      %p176 = pnand %p174, %p175
      %p177 = pneg %p176
      // Predicated region
      $region9: #{tpu_custom_call.1} parent=5 // pred_check
        _
      $region10: #{tpu_custom_call.1} parent=5 // pred_check_branch
        %179 = sbr.rel (%p176) target = $region12
      $region11: #{tpu_custom_call.1} parent=5 // pred_region
        %s180 = ssub.s32 %s14, 1
        // Predicated region
        $region13: #{tpu_custom_call.1} parent=11 // pred_check
          %p181 = pneg %p47
        $region14: #{tpu_custom_call.1} parent=11 // pred_check_branch
          %183 = sbr.rel (%p181) target = $region16
        $region15: #{tpu_custom_call.1} parent=11 // pred_region
          _
        $region16: #{tpu_custom_call.1} parent=11 // pred_fallthru
          _
        // Predicated region
        $region17: #{tpu_custom_call.1} parent=11 // pred_check
          %p184 = pneg %p68
        $region18: #{tpu_custom_call.1} parent=11 // pred_check_branch
          %186 = sbr.rel (%p184) target = $region20
        $region19: #{tpu_custom_call.1} parent=11 // pred_region
          _
        $region20: #{tpu_custom_call.1} parent=11 // pred_fallthru
          _
        // Predicated region
        $region21: #{tpu_custom_call.1} parent=11 // pred_check
          %p187 = pneg %p89
        $region22: #{tpu_custom_call.1} parent=11 // pred_check_branch
          %189 = sbr.rel (%p187) target = $region24
        $region23: #{tpu_custom_call.1} parent=11 // pred_region
          _
        $region24: #{tpu_custom_call.1} parent=11 // pred_fallthru
          _
        // Predicated region
        $region25: #{tpu_custom_call.1} parent=11 // pred_check
          %p190 = pneg %p110
        $region26: #{tpu_custom_call.1} parent=11 // pred_check_branch
          %192 = sbr.rel (%p190) target = $region28
        $region27: #{tpu_custom_call.1} parent=11 // pred_region
          _
        $region28: #{tpu_custom_call.1} parent=11 // pred_fallthru
          _
      $region12: #{tpu_custom_call.1} parent=5 // pred_fallthru
        _
      %p193 = scmp.lt.s32.totalorder %s14, 2
      // Predicated region
      $region29: #{tpu_custom_call.1} parent=5 // pred_check
        %p194 = pneg %p193
      $region30: #{tpu_custom_call.1} parent=5 // pred_check_branch
        %196 = sbr.rel (%p194) target = $region32
      $region31: #{tpu_custom_call.1} parent=5 // pred_region
        // Predicated region
        $region33: #{tpu_custom_call.1} parent=31 // pred_check
          %p197 = pneg %p132
        $region34: #{tpu_custom_call.1} parent=31 // pred_check_branch
          %199 = sbr.rel (%p197) target = $region36
        $region35: #{tpu_custom_call.1} parent=31 // pred_region
          %s200 = smul.u32 2, %s22
          %p201 = scmp.lt.s32.totalorder %s21, 1
          %s202 = scalar_select %p201, %s21, 1
          %p203 = scmp.lt.s32.totalorder %s200, 1
          %s204 = scalar_select %p203, %s200, 1
          %s205 = smul.addr %s202, 2
          %s206 = sadd.s32 %s204, %s205
          %s207 = smul.addr %s206, 4
          %s208 = scalar_lea.vmem %s4, %s207
          %s209 = smul.u32 2, %s22
        $region36: #{tpu_custom_call.1} parent=31 // pred_fallthru
          _
      $region32: #{tpu_custom_call.1} parent=5 // pred_fallthru
        _
      %p210 = scmp.le.s32.totalorder 1, %s14
      %p211 = scmp.lt.s32.totalorder %s14, 3
      %p212 = pnand %p210, %p211
      %p213 = pneg %p212
      // Predicated region
      $region37: #{tpu_custom_call.1} parent=5 // pred_check
        _
      $region38: #{tpu_custom_call.1} parent=5 // pred_check_branch
        %215 = sbr.rel (%p212) target = $region40
      $region39: #{tpu_custom_call.1} parent=5 // pred_region
        %s216 = ssub.s32 %s14, 1
        %p217 = pneg %p47
        %p218 = pneg %p44
        %p219 = pneg %p68
        %p220 = pneg %p65
        %p221 = pneg %p89
        %p222 = pneg %p86
        %p223 = pneg %p110
        %p224 = pneg %p107
        %s225 = smul.u32 2, %s24
        %p226 = scmp.lt.s32.totalorder %s23, 1
        %s227 = scalar_select %p226, %s23, 1
        %p228 = scmp.lt.s32.totalorder %s225, 1
        %s229 = scalar_select %p228, %s225, 1
        %s230 = smul.addr %s227, 2
        %s231 = sadd.s32 %s229, %s230
        %s232 = smul.addr %s231, 4
        %s233 = scalar_lea.vmem %s4, %s232
        %p234 = pneg %p138
        %p235 = pneg %p135
        %p236 = pneg %p166
        %p237 = pneg %p163
        %s238 = sand.u32 %s153, 1
        %s239 = scalar_lea.sflag [#allocation3], %s238
        %s240 = sand.u32 %s153, 1
        %s241 = smul.addr %s240, 64
        %s242 = scalar_lea.vmem [#allocation2], %s241
        %s243 = smul.u32 2, %s24
        %p244 = scmp.lt.s32.totalorder %s23, 1
        %s245 = scalar_select %p244, %s23, 1
        %p246 = scmp.lt.s32.totalorder %s243, 1
        %s247 = scalar_select %p246, %s243, 1
        %s248 = smul.addr %s245, 2
        %s249 = sadd.s32 %s247, %s248
        %s250 = smul.addr %s249, 4
        %s251 = scalar_lea.vmem %s4, %s250
        %s252 = smul.u32 2, %s24
        %s253 = smul.u32 2, %s24
        %v254 = vld [vmem:[%s251] sm:$0xff]
        %v255 = vld [vmem:[%s0] sm:$0xff]
        %v256 = vld [vmem:[%s0 + $0x8] sm:$0xff]
        %v257 = vld [vmem:[%s0 + $0x10] sm:$0xff]
        %v258 = vld [vmem:[%s0 + $0x18] sm:$0xff]
        %v259 = vld [vmem:[%s1] sm:$0xff]
        %v260 = vld [vmem:[%s1 + $0x8] sm:$0xff]
        %v261 = vld [vmem:[%s1 + $0x10] sm:$0xff]
        %v262 = vld [vmem:[%s1 + $0x18] sm:$0xff]
        %264 = vset.pattern.permute.xlu0 0
        %265 = vperm.xlu0 %264, %v259
        %v266 = vpop.permute.xlu0 %265
        %269 = vset.pattern.permute.xlu0 0
        %270 = vperm.xlu0 %269, %v260
        %v271 = vpop.permute.xlu0 %270
        %274 = vset.pattern.permute.xlu0 0
        %275 = vperm.xlu0 %274, %v261
        %v276 = vpop.permute.xlu0 %275
        %279 = vset.pattern.permute.xlu0 0
        %280 = vperm.xlu0 %279, %v262
        %v281 = vpop.permute.xlu0 %280
        %v284 = vcombine.high %v254, %v254
        %vm285 = vcmask 31744
        %v287 = vsel %vm285, %v255, 0
        %v290 = vsel %vm285, %v256, 0
        %v293 = vsel %vm285, %v257, 0
        %v296 = vsel %vm285, %v258, 0
        %vm298 = vcmask 1043456
        %v299 = vsel %vm298, %v254, 0
        %v301 = vsel %vm298, %v284, 0
        %303 = vmatprep.subr.mxu0 0.0
        %304 = vmatpush1.msra.mxu0 0.0
        %305 = vmatprep.subr.mxu0 0.0
        %306 = vmatpush1.msra.mxu0 0.0
        %307 = vmatprep.subr.mxu0 0.0
        %308 = vmatpush1.msra.mxu0 0.0
        %309 = vmatprep.subr.mxu0 0.0
        %310 = vmatpush1.msra.mxu0 0.0
        %311 = vmatprep.subr.mxu0 0.0
        %312 = vmatpush1.msra.mxu0 0.0
        %313 = vmatprep.subr.mxu0 0.0
        %314 = vmatpush1.msra.mxu0 0.0
        %315 = vmatprep.subr.mxu0 0.0
        %316 = vmatpush1.msra.mxu0 0.0
        %317 = vmatprep.subr.mxu0 0.0
        %318 = vmatpush1.msra.mxu0 0.0
        %319 = vmatprep.subr.mxu0 0.0
        %320 = vmatpush1.msra.mxu0 0.0
        %321 = vmatprep.subr.mxu0 0.0
        %322 = vmatpush1.msra.mxu0 0.0
        %323 = vmatprep.subr.mxu0 0.0
        %324 = vmatpush1.msra.mxu0 0.0
        %325 = vmatprep.subr.mxu0 0.0
        %326 = vmatpush1.msra.mxu0 0.0
        %327 = vmatprep.subr.mxu0 0.0
        %328 = vmatpush1.msra.mxu0 0.0
        %329 = vmatprep.subr.mxu0 0.0
        %330 = vmatpush1.msra.mxu0 0.0
        %331 = vmatprep.subr.mxu0 0.0
        %332 = vmatpush1.msra.mxu0 0.0
        %333 = vmatprep.subr.mxu0 %v301
        %334 = vmatpush1.msra.mxu0 %v299
        %335 = vmatprep.subr.mxu0 0.0
        %336 = vmatpush2.msra.mxu0 0.0
        %337 = vmatprep.subr.mxu0 0.0
        %338 = vmatpush2.msra.mxu0 0.0
        %339 = vmatprep.subr.mxu0 0.0
        %340 = vmatpush2.msra.mxu0 0.0
        %341 = vmatprep.subr.mxu0 0.0
        %342 = vmatpush2.msra.mxu0 0.0
        %343 = vmatprep.subr.mxu0 0.0
        %344 = vmatpush2.msra.mxu0 0.0
        %345 = vmatprep.subr.mxu0 0.0
        %346 = vmatpush2.msra.mxu0 0.0
        %347 = vmatprep.subr.mxu0 0.0
        %348 = vmatpush2.msra.mxu0 0.0
        %349 = vmatprep.subr.mxu0 0.0
        %350 = vmatpush2.msra.mxu0 0.0
        %351 = vmatprep.subr.mxu0 0.0
        %352 = vmatpush2.msra.mxu0 0.0
        %353 = vmatprep.subr.mxu0 0.0
        %354 = vmatpush2.msra.mxu0 0.0
        %355 = vmatprep.subr.mxu0 0.0
        %356 = vmatpush2.msra.mxu0 0.0
        %357 = vmatprep.subr.mxu0 0.0
        %358 = vmatpush2.msra.mxu0 0.0
        %359 = vmatprep.subr.mxu0 0.0
        %360 = vmatpush2.msra.mxu0 0.0
        %361 = vmatprep.subr.mxu0 0.0
        %362 = vmatpush2.msra.mxu0 0.0
        %363 = vmatprep.subr.mxu0 0.0
        %364 = vmatpush2.msra.mxu0 0.0
        %365 = vmatprep.subr.mxu0 0.0
        %366 = vmatpush2.msra.mxu0 0.0
        %367 = vmatprep.mubr.f32.mxu0 0.0
        %368 = vmatmul.mubr.f32.gmra.mxu0 %v287
        %v369 = vpop.f32.mrf.mxu0
        %v370 = vadd.f32 %v266, %v369
        %v371 = vpop.f32.mrf.mxu0
        %v372 = vadd.f32 %v266, %v371
        %373 = vmatprep.mubr.f32.mxu0 0.0
        %374 = vmatmul.mubr.f32.gmra.mxu0 %v290
        %v375 = vpop.f32.mrf.mxu0
        %v376 = vadd.f32 %v271, %v375
        %v377 = vpop.f32.mrf.mxu0
        %v378 = vadd.f32 %v271, %v377
        %379 = vmatprep.mubr.f32.mxu0 0.0
        %380 = vmatmul.mubr.f32.gmra.mxu0 %v293
        %v381 = vpop.f32.mrf.mxu0
        %v382 = vadd.f32 %v276, %v381
        %v383 = vpop.f32.mrf.mxu0
        %v384 = vadd.f32 %v276, %v383
        %385 = vmatprep.mubr.f32.mxu0 0.0
        %386 = vmatmul.mubr.f32.gmra.mxu0 %v296
        %v387 = vpop.f32.mrf.mxu0
        %v388 = vadd.f32 %v281, %v387
        %v389 = vpop.f32.mrf.mxu0
        %v390 = vadd.f32 %v281, %v389
        %391 = vdwg.mxu0
        %v392 = vmul.f32 %v370, 0.5
        %v393 = vmul.f32 %v372, 0.5
        %v394 = vmul.f32 %v376, 0.5
        %v395 = vmul.f32 %v378, 0.5
        %v396 = vmul.f32 %v382, 0.5
        %v397 = vmul.f32 %v384, 0.5
        %v398 = vmul.f32 %v388, 0.5
        %v399 = vmul.f32 %v390, 0.5
        %v400 = vmul.f32 %v370, 0.70710677
        %v401 = vmul.f32 %v372, 0.70710677
        %v402 = vmul.f32 %v376, 0.70710677
        %v403 = vmul.f32 %v378, 0.70710677
        %v404 = vmul.f32 %v382, 0.70710677
        %v405 = vmul.f32 %v384, 0.70710677
        %v406 = vmul.f32 %v388, 0.70710677
        %v407 = vmul.f32 %v390, 0.70710677
        %v408 = vand.u32 2147483647, %v400
        %v409 = vand.u32 2147483647, %v401
        %v410 = vand.u32 2147483647, %v402
        %v411 = vand.u32 2147483647, %v403
        %v412 = vand.u32 2147483647, %v404
        %v413 = vand.u32 2147483647, %v405
        %v414 = vand.u32 2147483647, %v406
        %v415 = vand.u32 2147483647, %v407
        %v416 = vmul.f32 %v408, 0.3275911
        %v417 = vmul.f32 %v409, 0.3275911
        %v418 = vmul.f32 %v410, 0.3275911
        %v419 = vmul.f32 %v411, 0.3275911
        %v420 = vmul.f32 %v412, 0.3275911
        %v421 = vmul.f32 %v413, 0.3275911
        %v422 = vmul.f32 %v414, 0.3275911
        %v423 = vmul.f32 %v415, 0.3275911
        %v424 = vadd.f32 %v416, 1.0
        %v425 = vadd.f32 %v417, 1.0
        %v426 = vadd.f32 %v418, 1.0
        %v427 = vadd.f32 %v419, 1.0
        %v428 = vadd.f32 %v420, 1.0
        %v429 = vadd.f32 %v421, 1.0
        %v430 = vadd.f32 %v422, 1.0
        %v431 = vadd.f32 %v423, 1.0
        %v432 = vrcp.pop %v424
        %v433 = vrcp.pop %v425
        %v434 = vrcp.pop %v426
        %v435 = vrcp.pop %v427
        %v436 = vrcp.pop %v428
        %v437 = vrcp.pop %v429
        %v438 = vrcp.pop %v430
        %v439 = vrcp.pop %v431
        %v440 = vmul.f32 %v424, %v432
        %v441 = vmul.f32 %v425, %v433
        %v442 = vmul.f32 %v426, %v434
        %v443 = vmul.f32 %v427, %v435
        %v444 = vmul.f32 %v428, %v436
        %v445 = vmul.f32 %v429, %v437
        %v446 = vmul.f32 %v430, %v438
        %v447 = vmul.f32 %v431, %v439
        %v448 = vsub.f32 2.0, %v440
        %v449 = vsub.f32 2.0, %v441
        %v450 = vsub.f32 2.0, %v442
        %v451 = vsub.f32 2.0, %v443
        %v452 = vsub.f32 2.0, %v444
        %v453 = vsub.f32 2.0, %v445
        %v454 = vsub.f32 2.0, %v446
        %v455 = vsub.f32 2.0, %v447
        %v456 = vmul.f32 %v432, %v448
        %v457 = vmul.f32 %v433, %v449
        %v458 = vmul.f32 %v434, %v450
        %v459 = vmul.f32 %v435, %v451
        %v460 = vmul.f32 %v436, %v452
        %v461 = vmul.f32 %v437, %v453
        %v462 = vmul.f32 %v438, %v454
        %v463 = vmul.f32 %v439, %v455
        %v464 = vmul.f32 %v456, 1.0614054
        %v465 = vmul.f32 %v457, 1.0614054
        %v466 = vmul.f32 %v458, 1.0614054
        %v467 = vmul.f32 %v459, 1.0614054
        %v468 = vmul.f32 %v460, 1.0614054
        %v469 = vmul.f32 %v461, 1.0614054
        %v470 = vmul.f32 %v462, 1.0614054
        %v471 = vmul.f32 %v463, 1.0614054
        %v472 = vadd.f32 %v464, -1.4531521
        %v473 = vadd.f32 %v465, -1.4531521
        %v474 = vadd.f32 %v466, -1.4531521
        %v475 = vadd.f32 %v467, -1.4531521
        %v476 = vadd.f32 %v468, -1.4531521
        %v477 = vadd.f32 %v469, -1.4531521
        %v478 = vadd.f32 %v470, -1.4531521
        %v479 = vadd.f32 %v471, -1.4531521
        %v480 = vmul.f32 %v472, %v456
        %v481 = vmul.f32 %v473, %v457
        %v482 = vmul.f32 %v474, %v458
        %v483 = vmul.f32 %v475, %v459
        %v484 = vmul.f32 %v476, %v460
        %v485 = vmul.f32 %v477, %v461
        %v486 = vmul.f32 %v478, %v462
        %v487 = vmul.f32 %v479, %v463
        %v488 = vadd.f32 %v480, 1.4214138
        %v489 = vadd.f32 %v481, 1.4214138
        %v490 = vadd.f32 %v482, 1.4214138
        %v491 = vadd.f32 %v483, 1.4214138
        %v492 = vadd.f32 %v484, 1.4214138
        %v493 = vadd.f32 %v485, 1.4214138
        %v494 = vadd.f32 %v486, 1.4214138
        %v495 = vadd.f32 %v487, 1.4214138
        %v496 = vmul.f32 %v488, %v456
        %v497 = vmul.f32 %v489, %v457
        %v498 = vmul.f32 %v490, %v458
        %v499 = vmul.f32 %v491, %v459
        %v500 = vmul.f32 %v492, %v460
        %v501 = vmul.f32 %v493, %v461
        %v502 = vmul.f32 %v494, %v462
        %v503 = vmul.f32 %v495, %v463
        %v504 = vadd.f32 %v496, -0.28449672
        %v505 = vadd.f32 %v497, -0.28449672
        %v506 = vadd.f32 %v498, -0.28449672
        %v507 = vadd.f32 %v499, -0.28449672
        %v508 = vadd.f32 %v500, -0.28449672
        %v509 = vadd.f32 %v501, -0.28449672
        %v510 = vadd.f32 %v502, -0.28449672
        %v511 = vadd.f32 %v503, -0.28449672
        %v512 = vmul.f32 %v504, %v456
        %v513 = vmul.f32 %v505, %v457
        %v514 = vmul.f32 %v506, %v458
        %v515 = vmul.f32 %v507, %v459
        %v516 = vmul.f32 %v508, %v460
        %v517 = vmul.f32 %v509, %v461
        %v518 = vmul.f32 %v510, %v462
        %v519 = vmul.f32 %v511, %v463
        %v520 = vadd.f32 %v512, 0.2548296
        %v521 = vadd.f32 %v513, 0.2548296
        %v522 = vadd.f32 %v514, 0.2548296
        %v523 = vadd.f32 %v515, 0.2548296
        %v524 = vadd.f32 %v516, 0.2548296
        %v525 = vadd.f32 %v517, 0.2548296
        %v526 = vadd.f32 %v518, 0.2548296
        %v527 = vadd.f32 %v519, 0.2548296
        %v528 = vmul.f32 %v520, %v456
        %v529 = vmul.f32 %v521, %v457
        %v530 = vmul.f32 %v522, %v458
        %v531 = vmul.f32 %v523, %v459
        %v532 = vmul.f32 %v524, %v460
        %v533 = vmul.f32 %v525, %v461
        %v534 = vmul.f32 %v526, %v462
        %v535 = vmul.f32 %v527, %v463
        %v536 = vsub.f32 0.0, %v408
        %v537 = vsub.f32 0.0, %v409
        %v538 = vsub.f32 0.0, %v410
        %v539 = vsub.f32 0.0, %v411
        %v540 = vsub.f32 0.0, %v412
        %v541 = vsub.f32 0.0, %v413
        %v542 = vsub.f32 0.0, %v414
        %v543 = vsub.f32 0.0, %v415
        %v544 = vmul.f32 %v536, %v408
        %v545 = vmul.f32 %v537, %v409
        %v546 = vmul.f32 %v538, %v410
        %v547 = vmul.f32 %v539, %v411
        %v548 = vmul.f32 %v540, %v412
        %v549 = vmul.f32 %v541, %v413
        %v550 = vmul.f32 %v542, %v414
        %v551 = vmul.f32 %v543, %v415
        %v552 = vmul.f32 %v544, 1.442695
        %v553 = vpow.pop %v552
        %v554 = vmul.f32 %v545, 1.442695
        %v555 = vpow.pop %v554
        %v556 = vmul.f32 %v546, 1.442695
        %v557 = vpow.pop %v556
        %v558 = vmul.f32 %v547, 1.442695
        %v559 = vpow.pop %v558
        %v560 = vmul.f32 %v548, 1.442695
        %v561 = vpow.pop %v560
        %v562 = vmul.f32 %v549, 1.442695
        %v563 = vpow.pop %v562
        %v564 = vmul.f32 %v550, 1.442695
        %v565 = vpow.pop %v564
        %v566 = vmul.f32 %v551, 1.442695
        %v567 = vpow.pop %v566
        %v568 = vmul.f32 %v528, %v553
        %v569 = vmul.f32 %v529, %v555
        %v570 = vmul.f32 %v530, %v557
        %v571 = vmul.f32 %v531, %v559
        %v572 = vmul.f32 %v532, %v561
        %v573 = vmul.f32 %v533, %v563
        %v574 = vmul.f32 %v534, %v565
        %v575 = vmul.f32 %v535, %v567
        %v576 = vsub.f32 1.0, %v568
        %v577 = vsub.f32 1.0, %v569
        %v578 = vsub.f32 1.0, %v570
        %v579 = vsub.f32 1.0, %v571
        %v580 = vsub.f32 1.0, %v572
        %v581 = vsub.f32 1.0, %v573
        %v582 = vsub.f32 1.0, %v574
        %v583 = vsub.f32 1.0, %v575
        %vm584 = vcmp.lt.f32.partialorder %v400, 0.0
        %vm585 = vcmp.lt.f32.partialorder %v401, 0.0
        %vm586 = vcmp.lt.f32.partialorder %v402, 0.0
        %vm587 = vcmp.lt.f32.partialorder %v403, 0.0
        %vm588 = vcmp.lt.f32.partialorder %v404, 0.0
        %vm589 = vcmp.lt.f32.partialorder %v405, 0.0
        %vm590 = vcmp.lt.f32.partialorder %v406, 0.0
        %vm591 = vcmp.lt.f32.partialorder %v407, 0.0
        %v592 = vsub.f32 0.0, %v576
        %v593 = vsub.f32 0.0, %v577
        %v594 = vsub.f32 0.0, %v578
        %v595 = vsub.f32 0.0, %v579
        %v596 = vsub.f32 0.0, %v580
        %v597 = vsub.f32 0.0, %v581
        %v598 = vsub.f32 0.0, %v582
        %v599 = vsub.f32 0.0, %v583
        %v600 = vsel %vm584, %v592, %v576
        %v601 = vsel %vm585, %v593, %v577
        %v602 = vsel %vm586, %v594, %v578
        %v603 = vsel %vm587, %v595, %v579
        %v604 = vsel %vm588, %v596, %v580
        %v605 = vsel %vm589, %v597, %v581
        %v606 = vsel %vm590, %v598, %v582
        %v607 = vsel %vm591, %v599, %v583
        %v608 = vadd.f32 %v600, 1.0
        %v609 = vadd.f32 %v601, 1.0
        %v610 = vadd.f32 %v602, 1.0
        %v611 = vadd.f32 %v603, 1.0
        %v612 = vadd.f32 %v604, 1.0
        %v613 = vadd.f32 %v605, 1.0
        %v614 = vadd.f32 %v606, 1.0
        %v615 = vadd.f32 %v607, 1.0
        %v616 = vmul.f32 %v392, %v608
        %v617 = vmul.f32 %v393, %v609
        %v618 = vmul.f32 %v394, %v610
        %v619 = vmul.f32 %v395, %v611
        %v620 = vmul.f32 %v396, %v612
        %v621 = vmul.f32 %v397, %v613
        %v622 = vmul.f32 %v398, %v614
        %v623 = vmul.f32 %v399, %v615
        %v624 = vld [vmem:[%s2] sm:$0xff]
        %v625 = vld [vmem:[%s2 + $0x8] sm:$0xff]
        %v626 = vld [vmem:[%s2 + $0x10] sm:$0xff]
        %v627 = vld [vmem:[%s2 + $0x18] sm:$0xff]
        %v628 = vld [vmem:[%s3] sm:$0xff]
        %v629 = vld [vmem:[%s3 + $0x8] sm:$0xff]
        %v630 = vld [vmem:[%s3 + $0x10] sm:$0xff]
        %v631 = vld [vmem:[%s3 + $0x18] sm:$0xff]
        %633 = vset.pattern.permute.xlu0 0
        %634 = vperm.xlu0 %633, %v628
        %v635 = vpop.permute.xlu0 %634
        %638 = vset.pattern.permute.xlu0 0
        %639 = vperm.xlu0 %638, %v629
        %v640 = vpop.permute.xlu0 %639
        %643 = vset.pattern.permute.xlu0 0
        %644 = vperm.xlu0 %643, %v630
        %v645 = vpop.permute.xlu0 %644
        %648 = vset.pattern.permute.xlu0 0
        %649 = vperm.xlu0 %648, %v631
        %v650 = vpop.permute.xlu0 %649
        %vm652 = vcmask 261120
        %v654 = vsel %vm652, %v624, 0
        %v657 = vsel %vm652, %v625, 0
        %v660 = vsel %vm652, %v626, 0
        %v663 = vsel %vm652, %v627, 0
        %665 = vmatprep.subr.mxu0 0.0
        %666 = vmatpush1.msra.mxu0 0.0
        %667 = vmatprep.subr.mxu0 0.0
        %668 = vmatpush1.msra.mxu0 0.0
        %669 = vmatprep.subr.mxu0 0.0
        %670 = vmatpush1.msra.mxu0 0.0
        %671 = vmatprep.subr.mxu0 0.0
        %672 = vmatpush1.msra.mxu0 0.0
        %673 = vmatprep.subr.mxu0 0.0
        %674 = vmatpush1.msra.mxu0 0.0
        %675 = vmatprep.subr.mxu0 0.0
        %676 = vmatpush1.msra.mxu0 0.0
        %677 = vmatprep.subr.mxu0 0.0
        %678 = vmatpush1.msra.mxu0 0.0
        %679 = vmatprep.subr.mxu0 0.0
        %680 = vmatpush1.msra.mxu0 0.0
        %681 = vmatprep.subr.mxu0 0.0
        %682 = vmatpush1.msra.mxu0 0.0
        %683 = vmatprep.subr.mxu0 0.0
        %684 = vmatpush1.msra.mxu0 0.0
        %685 = vmatprep.subr.mxu0 0.0
        %686 = vmatpush1.msra.mxu0 0.0
        %687 = vmatprep.subr.mxu0 0.0
        %688 = vmatpush1.msra.mxu0 0.0
        %689 = vmatprep.subr.mxu0 %v623
        %690 = vmatpush1.msra.mxu0 %v622
        %691 = vmatprep.subr.mxu0 %v621
        %692 = vmatpush1.msra.mxu0 %v620
        %693 = vmatprep.subr.mxu0 %v619
        %694 = vmatpush1.msra.mxu0 %v618
        %695 = vmatprep.subr.mxu0 %v617
        %696 = vmatpush1.msra.mxu0 %v616
        %697 = vmatprep.subr.mxu0 0.0
        %698 = vmatpush2.msra.mxu0 0.0
        %699 = vmatprep.subr.mxu0 0.0
        %700 = vmatpush2.msra.mxu0 0.0
        %701 = vmatprep.subr.mxu0 0.0
        %702 = vmatpush2.msra.mxu0 0.0
        %703 = vmatprep.subr.mxu0 0.0
        %704 = vmatpush2.msra.mxu0 0.0
        %705 = vmatprep.subr.mxu0 0.0
        %706 = vmatpush2.msra.mxu0 0.0
        %707 = vmatprep.subr.mxu0 0.0
        %708 = vmatpush2.msra.mxu0 0.0
        %709 = vmatprep.subr.mxu0 0.0
        %710 = vmatpush2.msra.mxu0 0.0
        %711 = vmatprep.subr.mxu0 0.0
        %712 = vmatpush2.msra.mxu0 0.0
        %713 = vmatprep.subr.mxu0 0.0
        %714 = vmatpush2.msra.mxu0 0.0
        %715 = vmatprep.subr.mxu0 0.0
        %716 = vmatpush2.msra.mxu0 0.0
        %717 = vmatprep.subr.mxu0 0.0
        %718 = vmatpush2.msra.mxu0 0.0
        %719 = vmatprep.subr.mxu0 0.0
        %720 = vmatpush2.msra.mxu0 0.0
        %721 = vmatprep.subr.mxu0 0.0
        %722 = vmatpush2.msra.mxu0 0.0
        %723 = vmatprep.subr.mxu0 0.0
        %724 = vmatpush2.msra.mxu0 0.0
        %725 = vmatprep.subr.mxu0 0.0
        %726 = vmatpush2.msra.mxu0 0.0
        %727 = vmatprep.subr.mxu0 0.0
        %728 = vmatpush2.msra.mxu0 0.0
        %729 = vmatprep.mubr.f32.mxu0 0.0
        %730 = vmatmul.mubr.f32.gmra.mxu0 %v654
        %v731 = vpop.f32.mrf.mxu0
        %v732 = vadd.f32 %v635, %v731
        %v733 = vpop.f32.mrf.mxu0
        %v734 = vadd.f32 %v635, %v733
        %735 = vmatprep.mubr.f32.mxu0 0.0
        %736 = vmatmul.mubr.f32.gmra.mxu0 %v657
        %v737 = vpop.f32.mrf.mxu0
        %v738 = vadd.f32 %v640, %v737
        %v739 = vpop.f32.mrf.mxu0
        %v740 = vadd.f32 %v640, %v739
        %741 = vmatprep.mubr.f32.mxu0 0.0
        %742 = vmatmul.mubr.f32.gmra.mxu0 %v660
        %v743 = vpop.f32.mrf.mxu0
        %v744 = vadd.f32 %v645, %v743
        %v745 = vpop.f32.mrf.mxu0
        %v746 = vadd.f32 %v645, %v745
        %747 = vmatprep.mubr.f32.mxu0 0.0
        %748 = vmatmul.mubr.f32.gmra.mxu0 %v663
        %v749 = vpop.f32.mrf.mxu0
        %v750 = vadd.f32 %v650, %v749
        %v751 = vpop.f32.mrf.mxu0
        %v752 = vadd.f32 %v650, %v751
        %753 = vdwg.mxu0
        %754 = vst [vmem:[%s242] sm:$0xff] %v732
        %755 = vst [vmem:[%s242 + $0x8] sm:$0xff] %v734
        %756 = vst [vmem:[%s242 + $0x10] sm:$0xff] %v738
        %757 = vst [vmem:[%s242 + $0x18] sm:$0xff] %v740
        %758 = vst [vmem:[%s242 + $0x20] sm:$0xff] %v744
        %759 = vst [vmem:[%s242 + $0x28] sm:$0xff] %v746
        %760 = vst [vmem:[%s242 + $0x30] sm:$0xff] %v750
        %761 = vst [vmem:[%s242 + $0x38] sm:$0xff] %v752
        %s762 = sand.u32 %s153, 1
        %s763 = scalar_lea.sflag [#allocation3], %s762
        %s764 = sand.u32 %s153, 1
        %s765 = smul.addr %s764, 64
        %s766 = scalar_lea.vmem [#allocation2], %s765
        // Predicated region
        $region41: #{tpu_custom_call.1} parent=39 // pred_check
          %p767 = pneg %p163
        $region42: #{tpu_custom_call.1} parent=39 // pred_check_branch
          %769 = sbr.rel (%p767) target = $region44
        $region43: #{tpu_custom_call.1} parent=39 // pred_region
          %s770 = smul.u32 2, %s24
          %s772 = ssub.s32 1024, 1024
          %773 = vsyncadd %s763, %s772
          %s774 = smul.addr %s23, 8
          %s775 = sadd.s32 %s770, %s774
          %s776 = smul.addr %s775, 128
          %s777 = scalar_lea.hbm %s5, %s776
          %s778 = sshll.u32 %s766, 4
          %s779 = int_to_ptr.vmem [resolvable:$true] %s778
          %784 = dma.vmem_to_hbm [thread:$0]  %s779, 1024, %s777, %s763, 256, 256, 16
        $region44: #{tpu_custom_call.1} parent=39 // pred_fallthru
          _
      $region40: #{tpu_custom_call.1} parent=5 // pred_fallthru
        _
      %p785 = scmp.le.s32.totalorder 2, %s14
      // Predicated region
      $region45: #{tpu_custom_call.1} parent=5 // pred_check
        %p786 = pneg %p785
      $region46: #{tpu_custom_call.1} parent=5 // pred_check_branch
        %788 = sbr.rel (%p786) target = $region48
      $region47: #{tpu_custom_call.1} parent=5 // pred_region
        %s789 = ssub.s32 %s14, 2
        // Predicated region
        $region49: #{tpu_custom_call.1} parent=47 // pred_check
          %p790 = pneg %p169
        $region50: #{tpu_custom_call.1} parent=47 // pred_check_branch
          %792 = sbr.rel (%p790) target = $region52
        $region51: #{tpu_custom_call.1} parent=47 // pred_region
          %s793 = sand.u32 %s154, 1
          %s794 = scalar_lea.sflag [#allocation3], %s793
          %s795 = sand.u32 %s154, 1
          %s796 = smul.addr %s795, 64
          %s797 = scalar_lea.vmem [#allocation2], %s796
          %798 = dma.done %s794, 1024
        $region52: #{tpu_custom_call.1} parent=47 // pred_fallthru
          _
      $region48: #{tpu_custom_call.1} parent=5 // pred_fallthru
        _
    $region6: #{tpu_custom_call.1} parent=1 // loop_footer
      %s18 = sadd.s32 1, %s14
    $region7: #{tpu_custom_call.1} parent=1 // loop_footer_branch
      %13 = sbr.rel target = $region3
    $region8: #{tpu_custom_call.1} parent=1 // loop_exit
      _
    %799 = vsyncpa [#allocation3], 1
    %s800 = scalar_lea.sflag [#allocation3], 1
    %801 = vsyncpa %s800, 1

// kernel: tpu_custom_call.1
$region0: #{tpu_custom_call.1}
  #allocation0 [shape = 'u32[]', space=smem, size = 0x4, offset = 0x4, fixed_abs, tag = 'smem constant byte address 0x4 - core index']
  #allocation1 [shape = 'u32[144,128]{1,0:T(1,128)}', space=vmem, size = 0x12000, scoped, tag = 'internal scratch']
  %s0 = inlined_call_operand.vmem [shape: f32[32,4], index: 0, kind: input, shape index: {}]
  %s1 = inlined_call_operand.vmem [shape: f32[32,1], index: 1, kind: input, shape index: {}]
  %s2 = inlined_call_operand.vmem [shape: f32[32,32], index: 2, kind: input, shape index: {}]
  %s3 = inlined_call_operand.vmem [shape: f32[32,1], index: 3, kind: input, shape index: {}]
  %s4 = inlined_call_operand.vmem [shape: f32[2,4,256], index: 4, kind: input, shape index: {}]
  %s5 = inlined_call_operand.hbm [shape: f32[2,32,256], index: 5, kind: output, shape index: {}]
  %s6 = sld [smem:[#allocation0]]
  $region53: #{tpu_custom_call.1} parent=0
    _
  %s8 = ssub.s32 1, %s6
  %s9 = scalar_select 0, %s8, %s6
  $region1: #{tpu_custom_call.1} parent=0
    #allocation2 [shape = 'u8[65536]{0}', space=vmem, size = 0x10000, scoped, tag = 'output window, operand 0']
    #allocation3 [shape = 's32[2]{0}', space=sflag, size = 0x8, scoped, tag = 'scoped memory for tpu_custom_call.1']
    %10 = vsyncpa [#allocation3], 0
    %s11 = scalar_lea.sflag [#allocation3], 1
    %12 = vsyncpa %s11, 0
    loop: start=0, step=1, limit=4
    $region2: #{tpu_custom_call.1} parent=1 // loop_pre_header
      _
    $region3: #{tpu_custom_call.1} parent=1 // loop_header
      %s14 = sphi 0, %s18
      %p15 = scmp.ge.s32.totalorder %s14, 4
      %s21 = sphi 0, %s33
      %s22 = sphi 0, %s29
      %s23 = sphi 0, %s21
      %s24 = sphi 0, %s22
      %s25 = sphi 0, %s23
      %s26 = sphi 0, %s24
      %s34 = sphi 0, %s34
      %s36 = sphi 0, %s34
      %s37 = sphi 0, %s36
      %s51 = sphi 0, %s37
      %s55 = sphi 0, %s55
      %s57 = sphi 0, %s55
      %s58 = sphi 0, %s57
      %s72 = sphi 0, %s58
      %s76 = sphi 0, %s76
      %s78 = sphi 0, %s76
      %s79 = sphi 0, %s78
      %s93 = sphi 0, %s79
      %s97 = sphi 0, %s97
      %s99 = sphi 0, %s97
      %s100 = sphi 0, %s99
      %s114 = sphi 0, %s100
      %s122 = sphi 0, %s124
      %s125 = sphi 0, %s122
      %s126 = sphi 0, %s125
      %s142 = sphi 0, %s126
      %s150 = sphi 0, %s152
      %s153 = sphi 0, %s150
      %s154 = sphi 0, %s153
      %s170 = sphi 0, %s154
    $region4: #{tpu_custom_call.1} parent=1 // loop_header_branch
      %17 = sbr.rel (%p15) target = $region8
    $region5: #{tpu_custom_call.1} parent=1 // loop_body
      %s19 = ssub.s32 %s14, 1
      %s20 = ssub.s32 %s14, 2
      %s27 = sadd.s32 1, %s22
      %p28 = scmp.ge.s32.totalorder %s27, 1
      %s29 = scalar_select %p28, 0, %s27
      %s30 = sadd.s32 1, %s21
      %s31 = scalar_select %p28, %s30, %s21
      %p32 = scmp.ge.s32.totalorder %s31, 2
      %s33 = scalar_select %p32, 0, %s31
      %s35 = sadd.s32 %s34, 1
      %p38 = scmp.eq.s32.totalorder %s14, 1
      %p39 = scmp.ne.s32.totalorder %s34, %s36
      %p40 = scmp.eq.s32.totalorder %s14, 0
      %p41 = por %p39, %p40
      %p42 = scmp.ne.s32.totalorder %s34, %s36
      %p43 = scmp.eq.s32.totalorder %s19, 1
      %p44 = por %p42, %p43
      %p45 = scmp.ne.s32.totalorder %s36, %s37
      %p46 = scmp.eq.s32.totalorder %s19, 0
      %p47 = por %p45, %p46
      %p48 = scmp.ne.s32.totalorder %s36, %s37
      %p49 = scmp.eq.s32.totalorder %s20, 1
      %p50 = por %p48, %p49
      %p52 = scmp.ne.s32.totalorder %s37, %s51
      %p53 = scmp.eq.s32.totalorder %s20, 0
      %p54 = por %p52, %p53
      %s56 = sadd.s32 %s55, 1
      %p59 = scmp.eq.s32.totalorder %s14, 1
      %p60 = scmp.ne.s32.totalorder %s55, %s57
      %p61 = scmp.eq.s32.totalorder %s14, 0
      %p62 = por %p60, %p61
      %p63 = scmp.ne.s32.totalorder %s55, %s57
      %p64 = scmp.eq.s32.totalorder %s19, 1
      %p65 = por %p63, %p64
      %p66 = scmp.ne.s32.totalorder %s57, %s58
      %p67 = scmp.eq.s32.totalorder %s19, 0
      %p68 = por %p66, %p67
      %p69 = scmp.ne.s32.totalorder %s57, %s58
      %p70 = scmp.eq.s32.totalorder %s20, 1
      %p71 = por %p69, %p70
      %p73 = scmp.ne.s32.totalorder %s58, %s72
      %p74 = scmp.eq.s32.totalorder %s20, 0
      %p75 = por %p73, %p74
      %s77 = sadd.s32 %s76, 1
      %p80 = scmp.eq.s32.totalorder %s14, 1
      %p81 = scmp.ne.s32.totalorder %s76, %s78
      %p82 = scmp.eq.s32.totalorder %s14, 0
      %p83 = por %p81, %p82
      %p84 = scmp.ne.s32.totalorder %s76, %s78
      %p85 = scmp.eq.s32.totalorder %s19, 1
      %p86 = por %p84, %p85
      %p87 = scmp.ne.s32.totalorder %s78, %s79
      %p88 = scmp.eq.s32.totalorder %s19, 0
      %p89 = por %p87, %p88
      %p90 = scmp.ne.s32.totalorder %s78, %s79
      %p91 = scmp.eq.s32.totalorder %s20, 1
      %p92 = por %p90, %p91
      %p94 = scmp.ne.s32.totalorder %s79, %s93
      %p95 = scmp.eq.s32.totalorder %s20, 0
      %p96 = por %p94, %p95
      %s98 = sadd.s32 %s97, 1
      %p101 = scmp.eq.s32.totalorder %s14, 1
      %p102 = scmp.ne.s32.totalorder %s97, %s99
      %p103 = scmp.eq.s32.totalorder %s14, 0
      %p104 = por %p102, %p103
      %p105 = scmp.ne.s32.totalorder %s97, %s99
      %p106 = scmp.eq.s32.totalorder %s19, 1
      %p107 = por %p105, %p106
      %p108 = scmp.ne.s32.totalorder %s99, %s100
      %p109 = scmp.eq.s32.totalorder %s19, 0
      %p110 = por %p108, %p109
      %p111 = scmp.ne.s32.totalorder %s99, %s100
      %p112 = scmp.eq.s32.totalorder %s20, 1
      %p113 = por %p111, %p112
      %p115 = scmp.ne.s32.totalorder %s100, %s114
      %p116 = scmp.eq.s32.totalorder %s20, 0
      %p117 = por %p115, %p116
      %s118 = ssub.s32 %s21, %s33
      %s119 = ssub.s32 %s22, %s29
      %s120 = sor.u32 %s118, %s119
      %p121 = scmp.eq.s32.totalorder %s120, 0
      %s123 = sadd.s32 %s122, 1
      %s124 = scalar_select %p121, %s122, %s123
      %p127 = pneg %p121
      %p128 = scmp.eq.s32.totalorder %s14, 1
      %p129 = por %p127, %p128
      %p130 = scmp.ne.s32.totalorder %s122, %s125
      %p131 = scmp.eq.s32.totalorder %s14, 0
      %p132 = por %p130, %p131
      %p133 = scmp.ne.s32.totalorder %s122, %s125
      %p134 = scmp.eq.s32.totalorder %s19, 1
      %p135 = por %p133, %p134
      %p136 = scmp.ne.s32.totalorder %s125, %s126
      %p137 = scmp.eq.s32.totalorder %s19, 0
      %p138 = por %p136, %p137
      %p139 = scmp.ne.s32.totalorder %s125, %s126
      %p140 = scmp.eq.s32.totalorder %s20, 1
      %p141 = por %p139, %p140
      %p143 = scmp.ne.s32.totalorder %s126, %s142
      %p144 = scmp.eq.s32.totalorder %s20, 0
      %p145 = por %p143, %p144
      %s146 = ssub.s32 %s21, %s33
      %s147 = ssub.s32 %s22, %s29
      %s148 = sor.u32 %s146, %s147
      %p149 = scmp.eq.s32.totalorder %s148, 0
      %s151 = sadd.s32 %s150, 1
      %s152 = scalar_select %p149, %s150, %s151
      %p155 = pneg %p149
      %p156 = scmp.eq.s32.totalorder %s14, 1
      %p157 = por %p155, %p156
      %p158 = scmp.ne.s32.totalorder %s150, %s153
      %p159 = scmp.eq.s32.totalorder %s14, 0
      %p160 = por %p158, %p159
      %p161 = scmp.ne.s32.totalorder %s150, %s153
      %p162 = scmp.eq.s32.totalorder %s19, 1
      %p163 = por %p161, %p162
      %p164 = scmp.ne.s32.totalorder %s153, %s154
      %p165 = scmp.eq.s32.totalorder %s19, 0
      %p166 = por %p164, %p165
      %p167 = scmp.ne.s32.totalorder %s153, %s154
      %p168 = scmp.eq.s32.totalorder %s20, 1
      %p169 = por %p167, %p168
      %p171 = scmp.ne.s32.totalorder %s154, %s170
      %p172 = scmp.eq.s32.totalorder %s20, 0
      %p173 = por %p171, %p172
      %p174 = scmp.le.s32.totalorder 1, %s14
      %p175 = scmp.lt.s32.totalorder %s14, 3
      %p176 = pnand %p174, %p175
      %p177 = pneg %p176
      // Predicated region
      $region9: #{tpu_custom_call.1} parent=5 // pred_check
        _
      $region10: #{tpu_custom_call.1} parent=5 // pred_check_branch
        %179 = sbr.rel (%p176) target = $region12
      $region11: #{tpu_custom_call.1} parent=5 // pred_region
        %s180 = ssub.s32 %s14, 1
        // Predicated region
        $region13: #{tpu_custom_call.1} parent=11 // pred_check
          %p181 = pneg %p47
        $region14: #{tpu_custom_call.1} parent=11 // pred_check_branch
          %183 = sbr.rel (%p181) target = $region16
        $region15: #{tpu_custom_call.1} parent=11 // pred_region
          _
        $region16: #{tpu_custom_call.1} parent=11 // pred_fallthru
          _
        // Predicated region
        $region17: #{tpu_custom_call.1} parent=11 // pred_check
          %p184 = pneg %p68
        $region18: #{tpu_custom_call.1} parent=11 // pred_check_branch
          %186 = sbr.rel (%p184) target = $region20
        $region19: #{tpu_custom_call.1} parent=11 // pred_region
          _
        $region20: #{tpu_custom_call.1} parent=11 // pred_fallthru
          _
        // Predicated region
        $region21: #{tpu_custom_call.1} parent=11 // pred_check
          %p187 = pneg %p89
        $region22: #{tpu_custom_call.1} parent=11 // pred_check_branch
          %189 = sbr.rel (%p187) target = $region24
        $region23: #{tpu_custom_call.1} parent=11 // pred_region
          _
        $region24: #{tpu_custom_call.1} parent=11 // pred_fallthru
          _
        // Predicated region
        $region25: #{tpu_custom_call.1} parent=11 // pred_check
          %p190 = pneg %p110
        $region26: #{tpu_custom_call.1} parent=11 // pred_check_branch
          %192 = sbr.rel (%p190) target = $region28
        $region27: #{tpu_custom_call.1} parent=11 // pred_region
          _
        $region28: #{tpu_custom_call.1} parent=11 // pred_fallthru
          _
      $region12: #{tpu_custom_call.1} parent=5 // pred_fallthru
        _
      %p193 = scmp.lt.s32.totalorder %s14, 2
      // Predicated region
      $region29: #{tpu_custom_call.1} parent=5 // pred_check
        %p194 = pneg %p193
      $region30: #{tpu_custom_call.1} parent=5 // pred_check_branch
        %196 = sbr.rel (%p194) target = $region32
      $region31: #{tpu_custom_call.1} parent=5 // pred_region
        // Predicated region
        $region33: #{tpu_custom_call.1} parent=31 // pred_check
          %p197 = pneg %p132
        $region34: #{tpu_custom_call.1} parent=31 // pred_check_branch
          %199 = sbr.rel (%p197) target = $region36
        $region35: #{tpu_custom_call.1} parent=31 // pred_region
          %s200 = smul.u32 2, %s22
          %p201 = scmp.lt.s32.totalorder %s21, 1
          %s202 = scalar_select %p201, %s21, 1
          %p203 = scmp.lt.s32.totalorder %s200, 1
          %s204 = scalar_select %p203, %s200, 1
          %s205 = smul.addr %s202, 2
          %s206 = sadd.s32 %s204, %s205
          %s207 = smul.addr %s206, 4
          %s208 = scalar_lea.vmem %s4, %s207
          %s209 = smul.u32 2, %s22
        $region36: #{tpu_custom_call.1} parent=31 // pred_fallthru
          _
      $region32: #{tpu_custom_call.1} parent=5 // pred_fallthru
        _
      %p210 = scmp.le.s32.totalorder 1, %s14
      %p211 = scmp.lt.s32.totalorder %s14, 3
      %p212 = pnand %p210, %p211
      %p213 = pneg %p212
      // Predicated region
      $region37: #{tpu_custom_call.1} parent=5 // pred_check
        _
      $region38: #{tpu_custom_call.1} parent=5 // pred_check_branch
        %215 = sbr.rel (%p212) target = $region40
      $region39: #{tpu_custom_call.1} parent=5 // pred_region
        %s216 = ssub.s32 %s14, 1
        %p217 = pneg %p47
        %p218 = pneg %p44
        %p219 = pneg %p68
        %p220 = pneg %p65
        %p221 = pneg %p89
        %p222 = pneg %p86
        %p223 = pneg %p110
        %p224 = pneg %p107
        %s225 = smul.u32 2, %s24
        %p226 = scmp.lt.s32.totalorder %s23, 1
        %s227 = scalar_select %p226, %s23, 1
        %p228 = scmp.lt.s32.totalorder %s225, 1
        %s229 = scalar_select %p228, %s225, 1
        %s230 = smul.addr %s227, 2
        %s231 = sadd.s32 %s229, %s230
        %s232 = smul.addr %s231, 4
        %s233 = scalar_lea.vmem %s4, %s232
        %p234 = pneg %p138
        %p235 = pneg %p135
        %p236 = pneg %p166
        %p237 = pneg %p163
        %s238 = sand.u32 %s153, 1
        %s239 = scalar_lea.sflag [#allocation3], %s238
        %s240 = sand.u32 %s153, 1
        %s241 = smul.addr %s240, 64
        %s242 = scalar_lea.vmem [#allocation2], %s241
        %s243 = smul.u32 2, %s24
        %p244 = scmp.lt.s32.totalorder %s23, 1
        %s245 = scalar_select %p244, %s23, 1
        %p246 = scmp.lt.s32.totalorder %s243, 1
        %s247 = scalar_select %p246, %s243, 1
        %s248 = smul.addr %s245, 2
        %s249 = sadd.s32 %s247, %s248
        %s250 = smul.addr %s249, 4
        %s251 = scalar_lea.vmem %s4, %s250
        %s252 = smul.u32 2, %s24
        %s253 = smul.u32 2, %s24
        %v254 = vld [vmem:[%s251] sm:$0xff]
        %v255 = vld [vmem:[%s0] sm:$0xff]
        %v256 = vld [vmem:[%s0 + $0x8] sm:$0xff]
        %v257 = vld [vmem:[%s0 + $0x10] sm:$0xff]
        %v258 = vld [vmem:[%s0 + $0x18] sm:$0xff]
        %v259 = vld [vmem:[%s1] sm:$0xff]
        %v260 = vld [vmem:[%s1 + $0x8] sm:$0xff]
        %v261 = vld [vmem:[%s1 + $0x10] sm:$0xff]
        %v262 = vld [vmem:[%s1 + $0x18] sm:$0xff]
        %264 = vset.pattern.permute.xlu0 0
        %265 = vperm.xlu0 %264, %v259
        %v266 = vpop.permute.xlu0 %265
        %269 = vset.pattern.permute.xlu0 0
        %270 = vperm.xlu0 %269, %v260
        %v271 = vpop.permute.xlu0 %270
        %274 = vset.pattern.permute.xlu0 0
        %275 = vperm.xlu0 %274, %v261
        %v276 = vpop.permute.xlu0 %275
        %279 = vset.pattern.permute.xlu0 0
        %280 = vperm.xlu0 %279, %v262
        %v281 = vpop.permute.xlu0 %280
        %v284 = vcombine.high %v254, %v254
        %vm285 = vcmask 31744
        %v287 = vsel %vm285, %v255, 0
        %v290 = vsel %vm285, %v256, 0
        %v293 = vsel %vm285, %v257, 0
        %v296 = vsel %vm285, %v258, 0
        %vm298 = vcmask 1043456
        %v299 = vsel %vm298, %v254, 0
        %v301 = vsel %vm298, %v284, 0
        %303 = vmatprep.subr.mxu0 0.0
        %304 = vmatpush1.msra.mxu0 0.0
        %305 = vmatprep.subr.mxu0 0.0
        %306 = vmatpush1.msra.mxu0 0.0
        %307 = vmatprep.subr.mxu0 0.0
        %308 = vmatpush1.msra.mxu0 0.0
        %309 = vmatprep.subr.mxu0 0.0
        %310 = vmatpush1.msra.mxu0 0.0
        %311 = vmatprep.subr.mxu0 0.0
        %312 = vmatpush1.msra.mxu0 0.0
        %313 = vmatprep.subr.mxu0 0.0
        %314 = vmatpush1.msra.mxu0 0.0
        %315 = vmatprep.subr.mxu0 0.0
        %316 = vmatpush1.msra.mxu0 0.0
        %317 = vmatprep.subr.mxu0 0.0
        %318 = vmatpush1.msra.mxu0 0.0
        %319 = vmatprep.subr.mxu0 0.0
        %320 = vmatpush1.msra.mxu0 0.0
        %321 = vmatprep.subr.mxu0 0.0
        %322 = vmatpush1.msra.mxu0 0.0
        %323 = vmatprep.subr.mxu0 0.0
        %324 = vmatpush1.msra.mxu0 0.0
        %325 = vmatprep.subr.mxu0 0.0
        %326 = vmatpush1.msra.mxu0 0.0
        %327 = vmatprep.subr.mxu0 0.0
        %328 = vmatpush1.msra.mxu0 0.0
        %329 = vmatprep.subr.mxu0 0.0
        %330 = vmatpush1.msra.mxu0 0.0
        %331 = vmatprep.subr.mxu0 0.0
        %332 = vmatpush1.msra.mxu0 0.0
        %333 = vmatprep.subr.mxu0 %v301
        %334 = vmatpush1.msra.mxu0 %v299
        %335 = vmatprep.subr.mxu0 0.0
        %336 = vmatpush2.msra.mxu0 0.0
        %337 = vmatprep.subr.mxu0 0.0
        %338 = vmatpush2.msra.mxu0 0.0
        %339 = vmatprep.subr.mxu0 0.0
        %340 = vmatpush2.msra.mxu0 0.0
        %341 = vmatprep.subr.mxu0 0.0
        %342 = vmatpush2.msra.mxu0 0.0
        %343 = vmatprep.subr.mxu0 0.0
        %344 = vmatpush2.msra.mxu0 0.0
        %345 = vmatprep.subr.mxu0 0.0
        %346 = vmatpush2.msra.mxu0 0.0
        %347 = vmatprep.subr.mxu0 0.0
        %348 = vmatpush2.msra.mxu0 0.0
        %349 = vmatprep.subr.mxu0 0.0
        %350 = vmatpush2.msra.mxu0 0.0
        %351 = vmatprep.subr.mxu0 0.0
        %352 = vmatpush2.msra.mxu0 0.0
        %353 = vmatprep.subr.mxu0 0.0
        %354 = vmatpush2.msra.mxu0 0.0
        %355 = vmatprep.subr.mxu0 0.0
        %356 = vmatpush2.msra.mxu0 0.0
        %357 = vmatprep.subr.mxu0 0.0
        %358 = vmatpush2.msra.mxu0 0.0
        %359 = vmatprep.subr.mxu0 0.0
        %360 = vmatpush2.msra.mxu0 0.0
        %361 = vmatprep.subr.mxu0 0.0
        %362 = vmatpush2.msra.mxu0 0.0
        %363 = vmatprep.subr.mxu0 0.0
        %364 = vmatpush2.msra.mxu0 0.0
        %365 = vmatprep.subr.mxu0 0.0
        %366 = vmatpush2.msra.mxu0 0.0
        %367 = vmatprep.mubr.f32.mxu0 0.0
        %368 = vmatmul.mubr.f32.gmra.mxu0 %v287
        %v369 = vpop.f32.mrf.mxu0
        %v370 = vadd.f32 %v266, %v369
        %v371 = vpop.f32.mrf.mxu0
        %v372 = vadd.f32 %v266, %v371
        %373 = vmatprep.mubr.f32.mxu0 0.0
        %374 = vmatmul.mubr.f32.gmra.mxu0 %v290
        %v375 = vpop.f32.mrf.mxu0
        %v376 = vadd.f32 %v271, %v375
        %v377 = vpop.f32.mrf.mxu0
        %v378 = vadd.f32 %v271, %v377
        %379 = vmatprep.mubr.f32.mxu0 0.0
        %380 = vmatmul.mubr.f32.gmra.mxu0 %v293
        %v381 = vpop.f32.mrf.mxu0
        %v382 = vadd.f32 %v276, %v381
        %v383 = vpop.f32.mrf.mxu0
        %v384 = vadd.f32 %v276, %v383
        %385 = vmatprep.mubr.f32.mxu0 0.0
        %386 = vmatmul.mubr.f32.gmra.mxu0 %v296
        %v387 = vpop.f32.mrf.mxu0
        %v388 = vadd.f32 %v281, %v387
        %v389 = vpop.f32.mrf.mxu0
        %v390 = vadd.f32 %v281, %v389
        %391 = vdwg.mxu0
        %v392 = vmul.f32 %v370, 0.5
        %v393 = vmul.f32 %v372, 0.5
        %v394 = vmul.f32 %v376, 0.5
        %v395 = vmul.f32 %v378, 0.5
        %v396 = vmul.f32 %v382, 0.5
        %v397 = vmul.f32 %v384, 0.5
        %v398 = vmul.f32 %v388, 0.5
        %v399 = vmul.f32 %v390, 0.5
        %v400 = vmul.f32 %v370, 0.70710677
        %v401 = vmul.f32 %v372, 0.70710677
        %v402 = vmul.f32 %v376, 0.70710677
        %v403 = vmul.f32 %v378, 0.70710677
        %v404 = vmul.f32 %v382, 0.70710677
        %v405 = vmul.f32 %v384, 0.70710677
        %v406 = vmul.f32 %v388, 0.70710677
        %v407 = vmul.f32 %v390, 0.70710677
        %v408 = vand.u32 2147483647, %v400
        %v409 = vand.u32 2147483647, %v401
        %v410 = vand.u32 2147483647, %v402
        %v411 = vand.u32 2147483647, %v403
        %v412 = vand.u32 2147483647, %v404
        %v413 = vand.u32 2147483647, %v405
        %v414 = vand.u32 2147483647, %v406
        %v415 = vand.u32 2147483647, %v407
        %v416 = vmul.f32 %v408, 0.3275911
        %v417 = vmul.f32 %v409, 0.3275911
        %v418 = vmul.f32 %v410, 0.3275911
        %v419 = vmul.f32 %v411, 0.3275911
        %v420 = vmul.f32 %v412, 0.3275911
        %v421 = vmul.f32 %v413, 0.3275911
        %v422 = vmul.f32 %v414, 0.3275911
        %v423 = vmul.f32 %v415, 0.3275911
        %v424 = vadd.f32 %v416, 1.0
        %v425 = vadd.f32 %v417, 1.0
        %v426 = vadd.f32 %v418, 1.0
        %v427 = vadd.f32 %v419, 1.0
        %v428 = vadd.f32 %v420, 1.0
        %v429 = vadd.f32 %v421, 1.0
        %v430 = vadd.f32 %v422, 1.0
        %v431 = vadd.f32 %v423, 1.0
        %v432 = vrcp.pop %v424
        %v433 = vrcp.pop %v425
        %v434 = vrcp.pop %v426
        %v435 = vrcp.pop %v427
        %v436 = vrcp.pop %v428
        %v437 = vrcp.pop %v429
        %v438 = vrcp.pop %v430
        %v439 = vrcp.pop %v431
        %v440 = vmul.f32 %v424, %v432
        %v441 = vmul.f32 %v425, %v433
        %v442 = vmul.f32 %v426, %v434
        %v443 = vmul.f32 %v427, %v435
        %v444 = vmul.f32 %v428, %v436
        %v445 = vmul.f32 %v429, %v437
        %v446 = vmul.f32 %v430, %v438
        %v447 = vmul.f32 %v431, %v439
        %v448 = vsub.f32 2.0, %v440
        %v449 = vsub.f32 2.0, %v441
        %v450 = vsub.f32 2.0, %v442
        %v451 = vsub.f32 2.0, %v443
        %v452 = vsub.f32 2.0, %v444
        %v453 = vsub.f32 2.0, %v445
        %v454 = vsub.f32 2.0, %v446
        %v455 = vsub.f32 2.0, %v447
        %v456 = vmul.f32 %v432, %v448
        %v457 = vmul.f32 %v433, %v449
        %v458 = vmul.f32 %v434, %v450
        %v459 = vmul.f32 %v435, %v451
        %v460 = vmul.f32 %v436, %v452
        %v461 = vmul.f32 %v437, %v453
        %v462 = vmul.f32 %v438, %v454
        %v463 = vmul.f32 %v439, %v455
        %v464 = vmul.f32 %v456, 1.0614054
        %v465 = vmul.f32 %v457, 1.0614054
        %v466 = vmul.f32 %v458, 1.0614054
        %v467 = vmul.f32 %v459, 1.0614054
        %v468 = vmul.f32 %v460, 1.0614054
        %v469 = vmul.f32 %v461, 1.0614054
        %v470 = vmul.f32 %v462, 1.0614054
        %v471 = vmul.f32 %v463, 1.0614054
        %v472 = vadd.f32 %v464, -1.4531521
        %v473 = vadd.f32 %v465, -1.4531521
        %v474 = vadd.f32 %v466, -1.4531521
        %v475 = vadd.f32 %v467, -1.4531521
        %v476 = vadd.f32 %v468, -1.4531521
        %v477 = vadd.f32 %v469, -1.4531521
        %v478 = vadd.f32 %v470, -1.4531521
        %v479 = vadd.f32 %v471, -1.4531521
        %v480 = vmul.f32 %v472, %v456
        %v481 = vmul.f32 %v473, %v457
        %v482 = vmul.f32 %v474, %v458
        %v483 = vmul.f32 %v475, %v459
        %v484 = vmul.f32 %v476, %v460
        %v485 = vmul.f32 %v477, %v461
        %v486 = vmul.f32 %v478, %v462
        %v487 = vmul.f32 %v479, %v463
        %v488 = vadd.f32 %v480, 1.4214138
        %v489 = vadd.f32 %v481, 1.4214138
        %v490 = vadd.f32 %v482, 1.4214138
        %v491 = vadd.f32 %v483, 1.4214138
        %v492 = vadd.f32 %v484, 1.4214138
        %v493 = vadd.f32 %v485, 1.4214138
        %v494 = vadd.f32 %v486, 1.4214138
        %v495 = vadd.f32 %v487, 1.4214138
        %v496 = vmul.f32 %v488, %v456
        %v497 = vmul.f32 %v489, %v457
        %v498 = vmul.f32 %v490, %v458
        %v499 = vmul.f32 %v491, %v459
        %v500 = vmul.f32 %v492, %v460
        %v501 = vmul.f32 %v493, %v461
        %v502 = vmul.f32 %v494, %v462
        %v503 = vmul.f32 %v495, %v463
        %v504 = vadd.f32 %v496, -0.28449672
        %v505 = vadd.f32 %v497, -0.28449672
        %v506 = vadd.f32 %v498, -0.28449672
        %v507 = vadd.f32 %v499, -0.28449672
        %v508 = vadd.f32 %v500, -0.28449672
        %v509 = vadd.f32 %v501, -0.28449672
        %v510 = vadd.f32 %v502, -0.28449672
        %v511 = vadd.f32 %v503, -0.28449672
        %v512 = vmul.f32 %v504, %v456
        %v513 = vmul.f32 %v505, %v457
        %v514 = vmul.f32 %v506, %v458
        %v515 = vmul.f32 %v507, %v459
        %v516 = vmul.f32 %v508, %v460
        %v517 = vmul.f32 %v509, %v461
        %v518 = vmul.f32 %v510, %v462
        %v519 = vmul.f32 %v511, %v463
        %v520 = vadd.f32 %v512, 0.2548296
        %v521 = vadd.f32 %v513, 0.2548296
        %v522 = vadd.f32 %v514, 0.2548296
        %v523 = vadd.f32 %v515, 0.2548296
        %v524 = vadd.f32 %v516, 0.2548296
        %v525 = vadd.f32 %v517, 0.2548296
        %v526 = vadd.f32 %v518, 0.2548296
        %v527 = vadd.f32 %v519, 0.2548296
        %v528 = vmul.f32 %v520, %v456
        %v529 = vmul.f32 %v521, %v457
        %v530 = vmul.f32 %v522, %v458
        %v531 = vmul.f32 %v523, %v459
        %v532 = vmul.f32 %v524, %v460
        %v533 = vmul.f32 %v525, %v461
        %v534 = vmul.f32 %v526, %v462
        %v535 = vmul.f32 %v527, %v463
        %v536 = vsub.f32 0.0, %v408
        %v537 = vsub.f32 0.0, %v409
        %v538 = vsub.f32 0.0, %v410
        %v539 = vsub.f32 0.0, %v411
        %v540 = vsub.f32 0.0, %v412
        %v541 = vsub.f32 0.0, %v413
        %v542 = vsub.f32 0.0, %v414
        %v543 = vsub.f32 0.0, %v415
        %v544 = vmul.f32 %v536, %v408
        %v545 = vmul.f32 %v537, %v409
        %v546 = vmul.f32 %v538, %v410
        %v547 = vmul.f32 %v539, %v411
        %v548 = vmul.f32 %v540, %v412
        %v549 = vmul.f32 %v541, %v413
        %v550 = vmul.f32 %v542, %v414
        %v551 = vmul.f32 %v543, %v415
        %v552 = vmul.f32 %v544, 1.442695
        %v553 = vpow.pop %v552
        %v554 = vmul.f32 %v545, 1.442695
        %v555 = vpow.pop %v554
        %v556 = vmul.f32 %v546, 1.442695
        %v557 = vpow.pop %v556
        %v558 = vmul.f32 %v547, 1.442695
        %v559 = vpow.pop %v558
        %v560 = vmul.f32 %v548, 1.442695
        %v561 = vpow.pop %v560
        %v562 = vmul.f32 %v549, 1.442695
        %v563 = vpow.pop %v562
        %v564 = vmul.f32 %v550, 1.442695
        %v565 = vpow.pop %v564
        %v566 = vmul.f32 %v551, 1.442695
        %v567 = vpow.pop %v566
        %v568 = vmul.f32 %v528, %v553
        %v569 = vmul.f32 %v529, %v555
        %v570 = vmul.f32 %v530, %v557
        %v571 = vmul.f32 %v531, %v559
        %v572 = vmul.f32 %v532, %v561
        %v573 = vmul.f32 %v533, %v563
        %v574 = vmul.f32 %v534, %v565
        %v575 = vmul.f32 %v535, %v567
        %v576 = vsub.f32 1.0, %v568
        %v577 = vsub.f32 1.0, %v569
        %v578 = vsub.f32 1.0, %v570
        %v579 = vsub.f32 1.0, %v571
        %v580 = vsub.f32 1.0, %v572
        %v581 = vsub.f32 1.0, %v573
        %v582 = vsub.f32 1.0, %v574
        %v583 = vsub.f32 1.0, %v575
        %vm584 = vcmp.lt.f32.partialorder %v400, 0.0
        %vm585 = vcmp.lt.f32.partialorder %v401, 0.0
        %vm586 = vcmp.lt.f32.partialorder %v402, 0.0
        %vm587 = vcmp.lt.f32.partialorder %v403, 0.0
        %vm588 = vcmp.lt.f32.partialorder %v404, 0.0
        %vm589 = vcmp.lt.f32.partialorder %v405, 0.0
        %vm590 = vcmp.lt.f32.partialorder %v406, 0.0
        %vm591 = vcmp.lt.f32.partialorder %v407, 0.0
        %v592 = vsub.f32 0.0, %v576
        %v593 = vsub.f32 0.0, %v577
        %v594 = vsub.f32 0.0, %v578
        %v595 = vsub.f32 0.0, %v579
        %v596 = vsub.f32 0.0, %v580
        %v597 = vsub.f32 0.0, %v581
        %v598 = vsub.f32 0.0, %v582
        %v599 = vsub.f32 0.0, %v583
        %v600 = vsel %vm584, %v592, %v576
        %v601 = vsel %vm585, %v593, %v577
        %v602 = vsel %vm586, %v594, %v578
        %v603 = vsel %vm587, %v595, %v579
        %v604 = vsel %vm588, %v596, %v580
        %v605 = vsel %vm589, %v597, %v581
        %v606 = vsel %vm590, %v598, %v582
        %v607 = vsel %vm591, %v599, %v583
        %v608 = vadd.f32 %v600, 1.0
        %v609 = vadd.f32 %v601, 1.0
        %v610 = vadd.f32 %v602, 1.0
        %v611 = vadd.f32 %v603, 1.0
        %v612 = vadd.f32 %v604, 1.0
        %v613 = vadd.f32 %v605, 1.0
        %v614 = vadd.f32 %v606, 1.0
        %v615 = vadd.f32 %v607, 1.0
        %v616 = vmul.f32 %v392, %v608
        %v617 = vmul.f32 %v393, %v609
        %v618 = vmul.f32 %v394, %v610
        %v619 = vmul.f32 %v395, %v611
        %v620 = vmul.f32 %v396, %v612
        %v621 = vmul.f32 %v397, %v613
        %v622 = vmul.f32 %v398, %v614
        %v623 = vmul.f32 %v399, %v615
        %v624 = vld [vmem:[%s2] sm:$0xff]
        %v625 = vld [vmem:[%s2 + $0x8] sm:$0xff]
        %v626 = vld [vmem:[%s2 + $0x10] sm:$0xff]
        %v627 = vld [vmem:[%s2 + $0x18] sm:$0xff]
        %v628 = vld [vmem:[%s3] sm:$0xff]
        %v629 = vld [vmem:[%s3 + $0x8] sm:$0xff]
        %v630 = vld [vmem:[%s3 + $0x10] sm:$0xff]
        %v631 = vld [vmem:[%s3 + $0x18] sm:$0xff]
        %633 = vset.pattern.permute.xlu0 0
        %634 = vperm.xlu0 %633, %v628
        %v635 = vpop.permute.xlu0 %634
        %638 = vset.pattern.permute.xlu0 0
        %639 = vperm.xlu0 %638, %v629
        %v640 = vpop.permute.xlu0 %639
        %643 = vset.pattern.permute.xlu0 0
        %644 = vperm.xlu0 %643, %v630
        %v645 = vpop.permute.xlu0 %644
        %648 = vset.pattern.permute.xlu0 0
        %649 = vperm.xlu0 %648, %v631
        %v650 = vpop.permute.xlu0 %649
        %vm652 = vcmask 261120
        %v654 = vsel %vm652, %v624, 0
        %v657 = vsel %vm652, %v625, 0
        %v660 = vsel %vm652, %v626, 0
        %v663 = vsel %vm652, %v627, 0
        %665 = vmatprep.subr.mxu0 0.0
        %666 = vmatpush1.msra.mxu0 0.0
        %667 = vmatprep.subr.mxu0 0.0
        %668 = vmatpush1.msra.mxu0 0.0
        %669 = vmatprep.subr.mxu0 0.0
        %670 = vmatpush1.msra.mxu0 0.0
        %671 = vmatprep.subr.mxu0 0.0
        %672 = vmatpush1.msra.mxu0 0.0
        %673 = vmatprep.subr.mxu0 0.0
        %674 = vmatpush1.msra.mxu0 0.0
        %675 = vmatprep.subr.mxu0 0.0
        %676 = vmatpush1.msra.mxu0 0.0
        %677 = vmatprep.subr.mxu0 0.0
        %678 = vmatpush1.msra.mxu0 0.0
        %679 = vmatprep.subr.mxu0 0.0
        %680 = vmatpush1.msra.mxu0 0.0
        %681 = vmatprep.subr.mxu0 0.0
        %682 = vmatpush1.msra.mxu0 0.0
        %683 = vmatprep.subr.mxu0 0.0
        %684 = vmatpush1.msra.mxu0 0.0
        %685 = vmatprep.subr.mxu0 0.0
        %686 = vmatpush1.msra.mxu0 0.0
        %687 = vmatprep.subr.mxu0 0.0
        %688 = vmatpush1.msra.mxu0 0.0
        %689 = vmatprep.subr.mxu0 %v623
        %690 = vmatpush1.msra.mxu0 %v622
        %691 = vmatprep.subr.mxu0 %v621
        %692 = vmatpush1.msra.mxu0 %v620
        %693 = vmatprep.subr.mxu0 %v619
        %694 = vmatpush1.msra.mxu0 %v618
        %695 = vmatprep.subr.mxu0 %v617
        %696 = vmatpush1.msra.mxu0 %v616
        %697 = vmatprep.subr.mxu0 0.0
        %698 = vmatpush2.msra.mxu0 0.0
        %699 = vmatprep.subr.mxu0 0.0
        %700 = vmatpush2.msra.mxu0 0.0
        %701 = vmatprep.subr.mxu0 0.0
        %702 = vmatpush2.msra.mxu0 0.0
        %703 = vmatprep.subr.mxu0 0.0
        %704 = vmatpush2.msra.mxu0 0.0
        %705 = vmatprep.subr.mxu0 0.0
        %706 = vmatpush2.msra.mxu0 0.0
        %707 = vmatprep.subr.mxu0 0.0
        %708 = vmatpush2.msra.mxu0 0.0
        %709 = vmatprep.subr.mxu0 0.0
        %710 = vmatpush2.msra.mxu0 0.0
        %711 = vmatprep.subr.mxu0 0.0
        %712 = vmatpush2.msra.mxu0 0.0
        %713 = vmatprep.subr.mxu0 0.0
        %714 = vmatpush2.msra.mxu0 0.0
        %715 = vmatprep.subr.mxu0 0.0
        %716 = vmatpush2.msra.mxu0 0.0
        %717 = vmatprep.subr.mxu0 0.0
        %718 = vmatpush2.msra.mxu0 0.0
        %719 = vmatprep.subr.mxu0 0.0
        %720 = vmatpush2.msra.mxu0 0.0
        %721 = vmatprep.subr.mxu0 0.0
        %722 = vmatpush2.msra.mxu0 0.0
        %723 = vmatprep.subr.mxu0 0.0
        %724 = vmatpush2.msra.mxu0 0.0
        %725 = vmatprep.subr.mxu0 0.0
        %726 = vmatpush2.msra.mxu0 0.0
        %727 = vmatprep.subr.mxu0 0.0
        %728 = vmatpush2.msra.mxu0 0.0
        %729 = vmatprep.mubr.f32.mxu0 0.0
        %730 = vmatmul.mubr.f32.gmra.mxu0 %v654
        %v731 = vpop.f32.mrf.mxu0
        %v732 = vadd.f32 %v635, %v731
        %v733 = vpop.f32.mrf.mxu0
        %v734 = vadd.f32 %v635, %v733
        %735 = vmatprep.mubr.f32.mxu0 0.0
        %736 = vmatmul.mubr.f32.gmra.mxu0 %v657
        %v737 = vpop.f32.mrf.mxu0
        %v738 = vadd.f32 %v640, %v737
        %v739 = vpop.f32.mrf.mxu0
        %v740 = vadd.f32 %v640, %v739
        %741 = vmatprep.mubr.f32.mxu0 0.0
        %742 = vmatmul.mubr.f32.gmra.mxu0 %v660
        %v743 = vpop.f32.mrf.mxu0
        %v744 = vadd.f32 %v645, %v743
        %v745 = vpop.f32.mrf.mxu0
        %v746 = vadd.f32 %v645, %v745
        %747 = vmatprep.mubr.f32.mxu0 0.0
        %748 = vmatmul.mubr.f32.gmra.mxu0 %v663
        %v749 = vpop.f32.mrf.mxu0
        %v750 = vadd.f32 %v650, %v749
        %v751 = vpop.f32.mrf.mxu0
        %v752 = vadd.f32 %v650, %v751
        %753 = vdwg.mxu0
        %754 = vst [vmem:[%s242] sm:$0xff] %v732
        %755 = vst [vmem:[%s242 + $0x8] sm:$0xff] %v734
        %756 = vst [vmem:[%s242 + $0x10] sm:$0xff] %v738
        %757 = vst [vmem:[%s242 + $0x18] sm:$0xff] %v740
        %758 = vst [vmem:[%s242 + $0x20] sm:$0xff] %v744
        %759 = vst [vmem:[%s242 + $0x28] sm:$0xff] %v746
        %760 = vst [vmem:[%s242 + $0x30] sm:$0xff] %v750
        %761 = vst [vmem:[%s242 + $0x38] sm:$0xff] %v752
        %s762 = sand.u32 %s153, 1
        %s763 = scalar_lea.sflag [#allocation3], %s762
        %s764 = sand.u32 %s153, 1
        %s765 = smul.addr %s764, 64
        %s766 = scalar_lea.vmem [#allocation2], %s765
        // Predicated region
        $region41: #{tpu_custom_call.1} parent=39 // pred_check
          %p767 = pneg %p163
        $region42: #{tpu_custom_call.1} parent=39 // pred_check_branch
          %769 = sbr.rel (%p767) target = $region44
        $region43: #{tpu_custom_call.1} parent=39 // pred_region
          %s770 = smul.u32 2, %s24
          %s772 = ssub.s32 1024, 1024
          %773 = vsyncadd %s763, %s772
          %s774 = smul.addr %s23, 8
          %s775 = sadd.s32 %s770, %s774
          %s776 = smul.addr %s775, 128
          %s777 = scalar_lea.hbm %s5, %s776
          %s778 = sshll.u32 %s766, 4
          %s779 = int_to_ptr.vmem [resolvable:$true] %s778
          %784 = dma.vmem_to_hbm [thread:$0]  %s779, 1024, %s777, %s763, 256, 256, 16
        $region44: #{tpu_custom_call.1} parent=39 // pred_fallthru
          _
      $region40: #{tpu_custom_call.1} parent=5 // pred_fallthru
        _
      %p785 = scmp.le.s32.totalorder 2, %s14
      // Predicated region
      $region45: #{tpu_custom_call.1} parent=5 // pred_check
        %p786 = pneg %p785
      $region46: #{tpu_custom_call.1} parent=5 // pred_check_branch
        %788 = sbr.rel (%p786) target = $region48
      $region47: #{tpu_custom_call.1} parent=5 // pred_region
        %s789 = ssub.s32 %s14, 2
        // Predicated region
        $region49: #{tpu_custom_call.1} parent=47 // pred_check
          %p790 = pneg %p169
        $region50: #{tpu_custom_call.1} parent=47 // pred_check_branch
          %792 = sbr.rel (%p790) target = $region52
        $region51: #{tpu_custom_call.1} parent=47 // pred_region
          %s793 = sand.u32 %s154, 1
          %s794 = scalar_lea.sflag [#allocation3], %s793
          %s795 = sand.u32 %s154, 1
          %s796 = smul.addr %s795, 64
          %s797 = scalar_lea.vmem [#allocation2], %s796
          %798 = dma.done %s794, 1024
        $region52: #{tpu_custom_call.1} parent=47 // pred_fallthru
          _
      $region48: #{tpu_custom_call.1} parent=5 // pred_fallthru
        _
    $region6: #{tpu_custom_call.1} parent=1 // loop_footer
      %s18 = sadd.s32 1, %s14
    $region7: #{tpu_custom_call.1} parent=1 // loop_footer_branch
      %13 = sbr.rel target = $region3
    $region8: #{tpu_custom_call.1} parent=1 // loop_exit
      _
    %799 = vsyncpa [#allocation3], 1
    %s800 = scalar_lea.sflag [#allocation3], 1
    %801 = vsyncpa %s800, 1

</llo_original>
